<compile_context>
chip_gen: v7x
topology: tpu7x:2x2x1
jax: 0.10.0
libtpu: 0.0.40
codegen_flags: <defaults>
</compile_context>

<pallas_src>
import jax
import jax.numpy as jnp
import numpy as np
from jax.experimental import pallas as pl
from jax.experimental.pallas import tpu as pltpu

EMBED_DIM = 128
NUM_HEADS = 8
HEAD_DIM = EMBED_DIM // NUM_HEADS


def _mha_kernel(x_ref, wqkv_ref, bqkv_ref, wo_ref, bo_ref, o_ref):
    """One batch tile per grid step.

    x_ref   : (Bt, L, E)  bf16
    wqkv_ref: (E, 3E)     bf16, columns = [Wq | Wk | Wv] (transposed; Wq pre-scaled)
    bqkv_ref: (1, 3E)     f32
    wo_ref  : (E, E)      bf16, out_proj weight (transposed)
    bo_ref  : (1, E)      f32
    o_ref   : (Bt, L, E)
    """
    f32 = jnp.float32
    bf16 = jnp.bfloat16
    Bt, L, E = x_ref.shape
    N = Bt * L
    H, Dh = NUM_HEADS, HEAD_DIM

    # ---- fused QKV projection on the flattened (Bt*L, E) tile --------------
    # bf16 operands, f32 accumulation.
    x = x_ref[...].reshape(N, E)
    qkv = jnp.dot(x, wqkv_ref[...], preferred_element_type=f32) + bqkv_ref[...]

    # ---- split heads: (N, E) -> (Bt*H, L, Dh) -------------------------------
    # The 128-lane -> 8x16-lane head split is an unavoidable relayout; it is
    # expressed as eight static 16-lane slices + one major-axis concat per
    # tensor (cost independent of Bt) so that every matmul and the softmax
    # below run batched over all Bt*H (batch, head) pairs in one shot.
    def split_heads(t):                                    # (N, E) f32
        t3 = t.reshape(Bt, L, E)
        return jnp.concatenate(
            [t3[:, :, h * Dh:(h + 1) * Dh] for h in range(H)], axis=0)

    q = split_heads(qkv[:, 0 * E:1 * E]).astype(bf16)   # Wq pre-scaled by 1/sqrt(Dh)
    k = split_heads(qkv[:, 1 * E:2 * E]).astype(bf16)
    v = split_heads(qkv[:, 2 * E:3 * E]).astype(bf16)

    # ---- batched attention core over all (batch, head) pairs ---------------
    # TODO(synk): for long sequences switch to a flash-style online-softmax
    # with a KV grid axis (and an explicit vmem_limit_bytes) instead of
    # materializing the (Bt*H, L, L) score stack -- the ceiling is hit ~2x
    # earlier on v7x (64 MiB VMEM) than on v5e/v6e (128 MiB).
    s = jnp.einsum('bqd,bkd->bqk', q, k,
                   preferred_element_type=f32)             # (Bt*H, L, L) f32
    s = s - jnp.max(s, axis=-1, keepdims=True)
    p = jnp.exp(s)
    p = p * pl.reciprocal(jnp.sum(p, axis=-1, keepdims=True), approx=True)

    ctx = jnp.einsum('bqk,bkd->bqd', p.astype(bf16), v,
                     preferred_element_type=f32)           # (Bt*H, L, Dh) f32

    # ---- merge heads back to one lane-dense (Bt, L, E) tile -----------------
    ctx = jnp.concatenate(
        [ctx[h * Bt:(h + 1) * Bt] for h in range(H)], axis=-1)   # (Bt, L, E)

    # ---- single full-width out-projection + one bias add --------------------
    out = jnp.dot(ctx.reshape(N, E).astype(bf16), wo_ref[...],
                  preferred_element_type=f32) + bo_ref[...]
    o_ref[...] = out.reshape(Bt, L, E).astype(o_ref.dtype)


def _pick_batch_tile(B, L):
    """Batch rows per grid step.

    - Tiny problems (B*L <= 256 flattened rows) are per-step-overhead bound:
      run a single grid step.
    - Otherwise target >= 256 flattened rows per step so the MXU M dimension
      fills (v6e/v7x MXU arrays are 256-wide), and only split into >= 2 grid
      steps (useful for v7x's two TensorCores) when each step still keeps
      >= 256 rows.  On single-TC chips (v5e/v6e) the grid is a sequential
      loop, so splitting below the row target just adds ~0.35us/step overhead.
    """
    if B * L <= 256:
        return B
    bt = min(B, max(1, -(-256 // L)))            # ceil(256 / L), capped at B
    if B // bt < 2 and B >= 2 and (B // 2) * L >= 256:
        bt = B // 2                              # keep 2 parallel steps if each still fills the MXU
    while B % bt:                                # largest divisor of B <= bt
        bt -= 1
    return max(bt, 1)


@jax.jit
def multihead_attention_pallas(x_bel, in_proj_w, in_proj_b, out_proj_w, out_proj_b):
    """x_bel: (B, E, L) as in the PyTorch module.  Returns (B, E, L)."""
    B, E, L = x_bel.shape
    assert E == EMBED_DIM

    # Glue: layout + parameter slicing/transposition (plain JAX, done once).
    x_ble = jnp.transpose(x_bel, (0, 2, 1))                          # (B, L, E)

    scale = 1.0 / float(np.sqrt(HEAD_DIM))
    wq = in_proj_w[0 * E:1 * E, :].T * scale     # fold query scaling into Wq/bq
    wk = in_proj_w[1 * E:2 * E, :].T
    wv = in_proj_w[2 * E:3 * E, :].T
    wqkv = jnp.concatenate([wq, wk, wv], axis=1)                     # (E, 3E)
    bqkv = jnp.concatenate([in_proj_b[0 * E:1 * E] * scale,
                            in_proj_b[1 * E:2 * E],
                            in_proj_b[2 * E:3 * E]], axis=0).reshape(1, 3 * E)
    wo = out_proj_w.T                                                # (E, E)
    bo = out_proj_b.reshape(1, E)

    # bf16 MXU operands (f32 accumulation + f32 softmax inside the kernel).
    x_bf = x_ble.astype(jnp.bfloat16)
    wqkv_bf = wqkv.astype(jnp.bfloat16)
    wo_bf = wo.astype(jnp.bfloat16)
    bqkv = bqkv.astype(jnp.float32)
    bo = bo.astype(jnp.float32)

    Bt = _pick_batch_tile(B, L)

    out_ble = pl.pallas_call(
        _mha_kernel,
        out_shape=jax.ShapeDtypeStruct((B, L, E), x_bel.dtype),
        grid_spec=pltpu.PrefetchScalarGridSpec(
            num_scalar_prefetch=0,
            grid=(B // Bt,),
            in_specs=[
                pl.BlockSpec((Bt, L, E), lambda b: (b, 0, 0)),       # x tile
                pl.BlockSpec((E, 3 * E), lambda b: (0, 0)),          # wqkv
                pl.BlockSpec((1, 3 * E), lambda b: (0, 0)),          # bqkv
                pl.BlockSpec((E, E), lambda b: (0, 0)),              # wo
                pl.BlockSpec((1, E), lambda b: (0, 0)),              # bo
            ],
            out_specs=pl.BlockSpec((Bt, L, E), lambda b: (b, 0, 0)),
        ),
        compiler_params=pltpu.CompilerParams(
            dimension_semantics=("parallel",)),
    )(x_bf, wqkv_bf, bqkv, wo_bf, bo)

    return jnp.transpose(out_ble, (0, 2, 1))                         # (B, E, L)


def _mha_reference(x_bel, in_proj_w, in_proj_b, out_proj_w, out_proj_b):
    """Pure-JAX f32 reference matching torch.nn.MultiheadAttention forward."""
    B, E, L = x_bel.shape
    x = jnp.transpose(x_bel, (0, 2, 1))                              # (B, L, E)
    wq, wk, wv = (in_proj_w[i * E:(i + 1) * E] for i in range(3))
    bq, bk, bv = (in_proj_b[i * E:(i + 1) * E] for i in range(3))
    q = x @ wq.T + bq
    k = x @ wk.T + bk
    v = x @ wv.T + bv

    def split(t):
        return t.reshape(B, L, NUM_HEADS, HEAD_DIM).transpose(0, 2, 1, 3)

    qh, kh, vh = split(q), split(k), split(v)
    s = jnp.einsum('bhld,bhmd->bhlm', qh / np.sqrt(HEAD_DIM), kh)
    p = jax.nn.softmax(s, axis=-1)
    a = jnp.einsum('bhlm,bhmd->bhld', p, vh)
    a = a.transpose(0, 2, 1, 3).reshape(B, L, E)
    o = a @ out_proj_w.T + out_proj_b
    return jnp.transpose(o, (0, 2, 1))                               # (B, E, L)


if __name__ == "__main__":
    B, L = 2, 8
    key = jax.random.PRNGKey(0)
    k_x, k_w1, k_b1, k_w2, k_b2 = jax.random.split(key, 5)

    # Deterministic synthetic parameters (shapes from nn.MultiheadAttention(128, 8)).
    x = jax.random.normal(k_x, (B, EMBED_DIM, L), dtype=jnp.float32)
    in_proj_w = jax.random.normal(k_w1, (3 * EMBED_DIM, EMBED_DIM), jnp.float32) * 0.05
    in_proj_b = jax.random.normal(k_b1, (3 * EMBED_DIM,), jnp.float32) * 0.02
    out_proj_w = jax.random.normal(k_w2, (EMBED_DIM, EMBED_DIM), jnp.float32) * 0.05
    out_proj_b = jax.random.normal(k_b2, (EMBED_DIM,), jnp.float32) * 0.02

    out = multihead_attention_pallas(x, in_proj_w, in_proj_b, out_proj_w, out_proj_b)
    out = jax.block_until_ready(out)

    ref = _mha_reference(x, in_proj_w, in_proj_b, out_proj_w, out_proj_b)
    # Tolerances account for bf16 MXU operands (f32 accumulation) and the
    # approx (EUP) reciprocal in the softmax normalizer.
    np.testing.assert_allclose(np.asarray(out), np.asarray(ref), rtol=2e-2, atol=2e-2)

    print("KERNEL_OK")
</pallas_src>

<mosaic_0001>
module attributes {stable_mosaic.version = 11 : i64} {
  func.func @_mha_kernel(%arg0: i32, %arg1: memref<2x8x128xbf16, #tpu.memory_space<vmem>>, %arg2: memref<128x384xbf16, #tpu.memory_space<vmem>>, %arg3: memref<1x384xf32, #tpu.memory_space<vmem>>, %arg4: memref<128x128xbf16, #tpu.memory_space<vmem>>, %arg5: memref<1x128xf32, #tpu.memory_space<vmem>>, %arg6: memref<2x8x128xf32, #tpu.memory_space<vmem>>) attributes {dimension_semantics = [#tpu.dimension_semantics<parallel>], iteration_bounds = array<i64: 1>, scalar_prefetch = 0 : i64, scratch_operands = 0 : i64, tpu.core_type = #tpu.core_type<tc>, window_params = [{transform_indices = @transform_0, window_bounds = array<i64: 2, 8, 128>}, {pipeline_mode = #tpu.pipeline_mode<synchronous>, transform_indices = @transform_1, window_bounds = array<i64: 128, 384>}, {pipeline_mode = #tpu.pipeline_mode<synchronous>, transform_indices = @transform_2, window_bounds = array<i64: 1, 384>}, {pipeline_mode = #tpu.pipeline_mode<synchronous>, transform_indices = @transform_3, window_bounds = array<i64: 128, 128>}, {pipeline_mode = #tpu.pipeline_mode<synchronous>, transform_indices = @transform_4, window_bounds = array<i64: 1, 128>}, {transform_indices = @transform_5, window_bounds = array<i64: 2, 8, 128>}]} {
    %c0 = arith.constant 0 : index
    %c0_0 = arith.constant 0 : index
    %c0_1 = arith.constant 0 : index
    %0 = vector.load %arg1[%c0, %c0_0, %c0_1] : memref<2x8x128xbf16, #tpu.memory_space<vmem>>, vector<2x8x128xbf16>
    %1 = vector.shape_cast %0 : vector<2x8x128xbf16> to vector<16x128xbf16>
    %c0_2 = arith.constant 0 : index
    %c0_3 = arith.constant 0 : index
    %2 = vector.load %arg2[%c0_2, %c0_3] : memref<128x384xbf16, #tpu.memory_space<vmem>>, vector<128x384xbf16>
    %cst = arith.constant dense<0.000000e+00> : vector<16x384xf32>
    %3 = tpu.matmul %1, %2, %cst {dimension_numbers = #tpu.dot_dimension_numbers<[1], [0], [0], [1], [0, 0, 1, 1], [], []>} : vector<16x128xbf16>, vector<128x384xbf16>, vector<16x384xf32> -> vector<16x384xf32>
    %c0_4 = arith.constant 0 : index
    %c0_5 = arith.constant 0 : index
    %4 = vector.load %arg3[%c0_4, %c0_5] : memref<1x384xf32, #tpu.memory_space<vmem>>, vector<1x384xf32>
    %5 = vector.broadcast %4 : vector<1x384xf32> to vector<16x384xf32>
    %6 = arith.addf %3, %5 : vector<16x384xf32>
    %7 = vector.extract_strided_slice %6 {offsets = [0, 0], sizes = [16, 128], strides = [1, 1]} : vector<16x384xf32> to vector<16x128xf32>
    %8 = vector.shape_cast %7 : vector<16x128xf32> to vector<2x8x128xf32>
    %9 = vector.extract_strided_slice %8 {offsets = [0, 0, 0], sizes = [2, 8, 16], strides = [1, 1, 1]} : vector<2x8x128xf32> to vector<2x8x16xf32>
    %10 = vector.extract_strided_slice %8 {offsets = [0, 0, 16], sizes = [2, 8, 16], strides = [1, 1, 1]} : vector<2x8x128xf32> to vector<2x8x16xf32>
    %11 = vector.extract_strided_slice %8 {offsets = [0, 0, 32], sizes = [2, 8, 16], strides = [1, 1, 1]} : vector<2x8x128xf32> to vector<2x8x16xf32>
    %12 = vector.extract_strided_slice %8 {offsets = [0, 0, 48], sizes = [2, 8, 16], strides = [1, 1, 1]} : vector<2x8x128xf32> to vector<2x8x16xf32>
    %13 = vector.extract_strided_slice %8 {offsets = [0, 0, 64], sizes = [2, 8, 16], strides = [1, 1, 1]} : vector<2x8x128xf32> to vector<2x8x16xf32>
    %14 = vector.extract_strided_slice %8 {offsets = [0, 0, 80], sizes = [2, 8, 16], strides = [1, 1, 1]} : vector<2x8x128xf32> to vector<2x8x16xf32>
    %15 = vector.extract_strided_slice %8 {offsets = [0, 0, 96], sizes = [2, 8, 16], strides = [1, 1, 1]} : vector<2x8x128xf32> to vector<2x8x16xf32>
    %16 = vector.extract_strided_slice %8 {offsets = [0, 0, 112], sizes = [2, 8, 16], strides = [1, 1, 1]} : vector<2x8x128xf32> to vector<2x8x16xf32>
    %17 = tpu.concatenate %9, %10, %11, %12, %13, %14, %15, %16 in 0 : vector<2x8x16xf32>, vector<2x8x16xf32>, vector<2x8x16xf32>, vector<2x8x16xf32>, vector<2x8x16xf32>, vector<2x8x16xf32>, vector<2x8x16xf32>, vector<2x8x16xf32> -> vector<16x8x16xf32>
    %18 = arith.truncf %17 : vector<16x8x16xf32> to vector<16x8x16xbf16>
    %19 = vector.extract_strided_slice %6 {offsets = [0, 128], sizes = [16, 128], strides = [1, 1]} : vector<16x384xf32> to vector<16x128xf32>
    %20 = vector.shape_cast %19 : vector<16x128xf32> to vector<2x8x128xf32>
    %21 = vector.extract_strided_slice %20 {offsets = [0, 0, 0], sizes = [2, 8, 16], strides = [1, 1, 1]} : vector<2x8x128xf32> to vector<2x8x16xf32>
    %22 = vector.extract_strided_slice %20 {offsets = [0, 0, 16], sizes = [2, 8, 16], strides = [1, 1, 1]} : vector<2x8x128xf32> to vector<2x8x16xf32>
    %23 = vector.extract_strided_slice %20 {offsets = [0, 0, 32], sizes = [2, 8, 16], strides = [1, 1, 1]} : vector<2x8x128xf32> to vector<2x8x16xf32>
    %24 = vector.extract_strided_slice %20 {offsets = [0, 0, 48], sizes = [2, 8, 16], strides = [1, 1, 1]} : vector<2x8x128xf32> to vector<2x8x16xf32>
    %25 = vector.extract_strided_slice %20 {offsets = [0, 0, 64], sizes = [2, 8, 16], strides = [1, 1, 1]} : vector<2x8x128xf32> to vector<2x8x16xf32>
    %26 = vector.extract_strided_slice %20 {offsets = [0, 0, 80], sizes = [2, 8, 16], strides = [1, 1, 1]} : vector<2x8x128xf32> to vector<2x8x16xf32>
    %27 = vector.extract_strided_slice %20 {offsets = [0, 0, 96], sizes = [2, 8, 16], strides = [1, 1, 1]} : vector<2x8x128xf32> to vector<2x8x16xf32>
    %28 = vector.extract_strided_slice %20 {offsets = [0, 0, 112], sizes = [2, 8, 16], strides = [1, 1, 1]} : vector<2x8x128xf32> to vector<2x8x16xf32>
    %29 = tpu.concatenate %21, %22, %23, %24, %25, %26, %27, %28 in 0 : vector<2x8x16xf32>, vector<2x8x16xf32>, vector<2x8x16xf32>, vector<2x8x16xf32>, vector<2x8x16xf32>, vector<2x8x16xf32>, vector<2x8x16xf32>, vector<2x8x16xf32> -> vector<16x8x16xf32>
    %30 = arith.truncf %29 : vector<16x8x16xf32> to vector<16x8x16xbf16>
    %31 = vector.extract_strided_slice %6 {offsets = [0, 256], sizes = [16, 128], strides = [1, 1]} : vector<16x384xf32> to vector<16x128xf32>
    %32 = vector.shape_cast %31 : vector<16x128xf32> to vector<2x8x128xf32>
    %33 = vector.extract_strided_slice %32 {offsets = [0, 0, 0], sizes = [2, 8, 16], strides = [1, 1, 1]} : vector<2x8x128xf32> to vector<2x8x16xf32>
    %34 = vector.extract_strided_slice %32 {offsets = [0, 0, 16], sizes = [2, 8, 16], strides = [1, 1, 1]} : vector<2x8x128xf32> to vector<2x8x16xf32>
    %35 = vector.extract_strided_slice %32 {offsets = [0, 0, 32], sizes = [2, 8, 16], strides = [1, 1, 1]} : vector<2x8x128xf32> to vector<2x8x16xf32>
    %36 = vector.extract_strided_slice %32 {offsets = [0, 0, 48], sizes = [2, 8, 16], strides = [1, 1, 1]} : vector<2x8x128xf32> to vector<2x8x16xf32>
    %37 = vector.extract_strided_slice %32 {offsets = [0, 0, 64], sizes = [2, 8, 16], strides = [1, 1, 1]} : vector<2x8x128xf32> to vector<2x8x16xf32>
    %38 = vector.extract_strided_slice %32 {offsets = [0, 0, 80], sizes = [2, 8, 16], strides = [1, 1, 1]} : vector<2x8x128xf32> to vector<2x8x16xf32>
    %39 = vector.extract_strided_slice %32 {offsets = [0, 0, 96], sizes = [2, 8, 16], strides = [1, 1, 1]} : vector<2x8x128xf32> to vector<2x8x16xf32>
    %40 = vector.extract_strided_slice %32 {offsets = [0, 0, 112], sizes = [2, 8, 16], strides = [1, 1, 1]} : vector<2x8x128xf32> to vector<2x8x16xf32>
    %41 = tpu.concatenate %33, %34, %35, %36, %37, %38, %39, %40 in 0 : vector<2x8x16xf32>, vector<2x8x16xf32>, vector<2x8x16xf32>, vector<2x8x16xf32>, vector<2x8x16xf32>, vector<2x8x16xf32>, vector<2x8x16xf32>, vector<2x8x16xf32> -> vector<16x8x16xf32>
    %42 = arith.truncf %41 : vector<16x8x16xf32> to vector<16x8x16xbf16>
    "tpu.trace_start"() <{level = 10 : i32, message = "bqd,bkd->bqk"}> : () -> ()
    %cst_6 = arith.constant dense<0.000000e+00> : vector<16x8x8xf32>
    %43 = tpu.matmul %18, %30, %cst_6 {dimension_numbers = #tpu.dot_dimension_numbers<[2], [2], [1], [1], [0, 0, 0, 1, 1, 1], [0], [0]>} : vector<16x8x16xbf16>, vector<16x8x16xbf16>, vector<16x8x8xf32> -> vector<16x8x8xf32>
    "tpu.trace_stop"() : () -> ()
    %cst_7 = arith.constant dense<0xFF800000> : vector<16x8xf32>
    %44 = vector.multi_reduction <maximumf>, %43, %cst_7 [2] : vector<16x8x8xf32> to vector<16x8xf32>
    %45 = vector.shape_cast %44 : vector<16x8xf32> to vector<16x8x1xf32>
    %46 = vector.broadcast %45 : vector<16x8x1xf32> to vector<16x8x8xf32>
    %47 = arith.subf %43, %46 : vector<16x8x8xf32>
    %48 = math.exp %47 : vector<16x8x8xf32>
    %cst_8 = arith.constant dense<0.000000e+00> : vector<16x8xf32>
    %49 = vector.multi_reduction <add>, %48, %cst_8 [2] : vector<16x8x8xf32> to vector<16x8xf32>
    %50 = vector.shape_cast %49 : vector<16x8xf32> to vector<16x8x1xf32>
    %51 = tpu.reciprocal %50 {approx = true} : vector<16x8x1xf32> -> vector<16x8x1xf32>
    %52 = vector.broadcast %51 : vector<16x8x1xf32> to vector<16x8x8xf32>
    %53 = arith.mulf %48, %52 : vector<16x8x8xf32>
    %54 = arith.truncf %53 : vector<16x8x8xf32> to vector<16x8x8xbf16>
    "tpu.trace_start"() <{level = 10 : i32, message = "bqk,bkd->bqd"}> : () -> ()
    %cst_9 = arith.constant dense<0.000000e+00> : vector<16x8x16xf32>
    %55 = tpu.matmul %54, %42, %cst_9 {dimension_numbers = #tpu.dot_dimension_numbers<[2], [1], [1], [2], [0, 0, 0, 1, 1, 2], [0], [0]>} : vector<16x8x8xbf16>, vector<16x8x16xbf16>, vector<16x8x16xf32> -> vector<16x8x16xf32>
    "tpu.trace_stop"() : () -> ()
    %56 = vector.extract_strided_slice %55 {offsets = [0, 0, 0], sizes = [2, 8, 16], strides = [1, 1, 1]} : vector<16x8x16xf32> to vector<2x8x16xf32>
    %57 = vector.extract_strided_slice %55 {offsets = [2, 0, 0], sizes = [2, 8, 16], strides = [1, 1, 1]} : vector<16x8x16xf32> to vector<2x8x16xf32>
    %58 = vector.extract_strided_slice %55 {offsets = [4, 0, 0], sizes = [2, 8, 16], strides = [1, 1, 1]} : vector<16x8x16xf32> to vector<2x8x16xf32>
    %59 = vector.extract_strided_slice %55 {offsets = [6, 0, 0], sizes = [2, 8, 16], strides = [1, 1, 1]} : vector<16x8x16xf32> to vector<2x8x16xf32>
    %60 = vector.extract_strided_slice %55 {offsets = [8, 0, 0], sizes = [2, 8, 16], strides = [1, 1, 1]} : vector<16x8x16xf32> to vector<2x8x16xf32>
    %61 = vector.extract_strided_slice %55 {offsets = [10, 0, 0], sizes = [2, 8, 16], strides = [1, 1, 1]} : vector<16x8x16xf32> to vector<2x8x16xf32>
    %62 = vector.extract_strided_slice %55 {offsets = [12, 0, 0], sizes = [2, 8, 16], strides = [1, 1, 1]} : vector<16x8x16xf32> to vector<2x8x16xf32>
    %63 = vector.extract_strided_slice %55 {offsets = [14, 0, 0], sizes = [2, 8, 16], strides = [1, 1, 1]} : vector<16x8x16xf32> to vector<2x8x16xf32>
    %64 = tpu.concatenate %56, %57, %58, %59, %60, %61, %62, %63 in 2 : vector<2x8x16xf32>, vector<2x8x16xf32>, vector<2x8x16xf32>, vector<2x8x16xf32>, vector<2x8x16xf32>, vector<2x8x16xf32>, vector<2x8x16xf32>, vector<2x8x16xf32> -> vector<2x8x128xf32>
    %65 = vector.shape_cast %64 : vector<2x8x128xf32> to vector<16x128xf32>
    %66 = arith.truncf %65 : vector<16x128xf32> to vector<16x128xbf16>
    %c0_10 = arith.constant 0 : index
    %c0_11 = arith.constant 0 : index
    %67 = vector.load %arg4[%c0_10, %c0_11] : memref<128x128xbf16, #tpu.memory_space<vmem>>, vector<128x128xbf16>
    %cst_12 = arith.constant dense<0.000000e+00> : vector<16x128xf32>
    %68 = tpu.matmul %66, %67, %cst_12 {dimension_numbers = #tpu.dot_dimension_numbers<[1], [0], [0], [1], [0, 0, 1, 1], [], []>} : vector<16x128xbf16>, vector<128x128xbf16>, vector<16x128xf32> -> vector<16x128xf32>
    %c0_13 = arith.constant 0 : index
    %c0_14 = arith.constant 0 : index
    %69 = vector.load %arg5[%c0_13, %c0_14] : memref<1x128xf32, #tpu.memory_space<vmem>>, vector<1x128xf32>
    %70 = vector.broadcast %69 : vector<1x128xf32> to vector<16x128xf32>
    %71 = arith.addf %68, %70 : vector<16x128xf32>
    %72 = vector.shape_cast %71 : vector<16x128xf32> to vector<2x8x128xf32>
    %c0_15 = arith.constant 0 : index
    %c0_16 = arith.constant 0 : index
    %c0_17 = arith.constant 0 : index
    %73 = vector.load %arg6[%c0_15, %c0_16, %c0_17] : memref<2x8x128xf32, #tpu.memory_space<vmem>>, vector<2x8x128xf32>
    tpu.vector_store %arg6[%c0_15, %c0_16, %c0_17], %72 {strides = array<i32>} : memref<2x8x128xf32, #tpu.memory_space<vmem>>, vector<2x8x128xf32>,
    return
  }
  func.func @transform_0(%arg0: i32) -> (i32, i32, i32) {
    %c0_i32 = arith.constant 0 : i32
    %c0_i32_0 = arith.constant 0 : i32
    %c0_i32_1 = arith.constant 0 : i32
    return %arg0, %c0_i32, %c0_i32_0 : i32, i32, i32
  }
  func.func @transform_1(%arg0: i32) -> (i32, i32) {
    %c0_i32 = arith.constant 0 : i32
    %c0_i32_0 = arith.constant 0 : i32
    %c0_i32_1 = arith.constant 0 : i32
    return %c0_i32, %c0_i32_0 : i32, i32
  }
  func.func @transform_2(%arg0: i32) -> (i32, i32) {
    %c0_i32 = arith.constant 0 : i32
    %c0_i32_0 = arith.constant 0 : i32
    %c0_i32_1 = arith.constant 0 : i32
    return %c0_i32, %c0_i32_0 : i32, i32
  }
  func.func @transform_3(%arg0: i32) -> (i32, i32) {
    %c0_i32 = arith.constant 0 : i32
    %c0_i32_0 = arith.constant 0 : i32
    %c0_i32_1 = arith.constant 0 : i32
    return %c0_i32, %c0_i32_0 : i32, i32
  }
  func.func @transform_4(%arg0: i32) -> (i32, i32) {
    %c0_i32 = arith.constant 0 : i32
    %c0_i32_0 = arith.constant 0 : i32
    %c0_i32_1 = arith.constant 0 : i32
    return %c0_i32, %c0_i32_0 : i32, i32
  }
  func.func @transform_5(%arg0: i32) -> (i32, i32, i32) {
    %c0_i32 = arith.constant 0 : i32
    %c0_i32_0 = arith.constant 0 : i32
    %c0_i32_1 = arith.constant 0 : i32
    return %arg0, %c0_i32, %c0_i32_0 : i32, i32, i32
  }
}

</mosaic_0001>

<llo_original>
// kernel: multihead_attention_pallas.1
$region0: #{multihead_attention_pallas.1}
  #allocation0 [shape = 'u32[]', space=smem, size = 0x4, offset = 0x4, fixed_abs, tag = 'smem constant byte address 0x4 - core index']
  #allocation1 [shape = 'u32[144,128]{1,0:T(1,128)}', space=vmem, size = 0x12000, scoped, tag = 'internal scratch']
  %s0 = inlined_call_operand.vmem [shape: bf16[2,8,128], index: 0, kind: input, shape index: {}]
  %s1 = inlined_call_operand.vmem [shape: bf16[128,384], index: 1, kind: input, shape index: {}]
  %s2 = inlined_call_operand.vmem [shape: f32[1,384], index: 2, kind: input, shape index: {}]
  %s3 = inlined_call_operand.vmem [shape: bf16[128,128], index: 3, kind: input, shape index: {}]
  %s4 = inlined_call_operand.vmem [shape: f32[1,128], index: 4, kind: input, shape index: {}]
  %s5 = inlined_call_operand.hbm [shape: f32[2,8,128], index: 5, kind: output, shape index: {}]
  %s6 = sld [smem:[#allocation0]]
  $region30: #{multihead_attention_pallas.1} parent=0
    _
  %s8 = ssub.s32 1, %s6
  %s9 = scalar_select 0, %s8, %s6
  $region1: #{multihead_attention_pallas.1} parent=0
    #allocation2 [shape = 'u8[8192]{0}', space=vmem, size = 0x2000, scoped, tag = 'output window, operand 0, single buffered']
    #allocation3 [shape = 's32[1]{0}', space=sflag, size = 0x4, scoped, tag = 'scoped memory for multihead_attention_pallas.1']
    %10 = vsyncpa [#allocation3], 0
    // Predicated region
    $region2: #{multihead_attention_pallas.1} parent=1 // pred_check
      _
    $region3: #{multihead_attention_pallas.1} parent=1 // pred_check_branch
      %12 = sbr.rel (0) target = $region5
    $region4: #{multihead_attention_pallas.1} parent=1 // pred_region
      _
    $region5: #{multihead_attention_pallas.1} parent=1 // pred_fallthru
      _
    // Predicated region
    $region6: #{multihead_attention_pallas.1} parent=1 // pred_check
      _
    $region7: #{multihead_attention_pallas.1} parent=1 // pred_check_branch
      %14 = sbr.rel (0) target = $region9
    $region8: #{multihead_attention_pallas.1} parent=1 // pred_region
      _
    $region9: #{multihead_attention_pallas.1} parent=1 // pred_fallthru
      _
    // Predicated region
    $region10: #{multihead_attention_pallas.1} parent=1 // pred_check
      _
    $region11: #{multihead_attention_pallas.1} parent=1 // pred_check_branch
      %16 = sbr.rel (0) target = $region13
    $region12: #{multihead_attention_pallas.1} parent=1 // pred_region
      _
    $region13: #{multihead_attention_pallas.1} parent=1 // pred_fallthru
      _
    // Predicated region
    $region14: #{multihead_attention_pallas.1} parent=1 // pred_check
      _
    $region15: #{multihead_attention_pallas.1} parent=1 // pred_check_branch
      %18 = sbr.rel (0) target = $region17
    $region16: #{multihead_attention_pallas.1} parent=1 // pred_region
      _
    $region17: #{multihead_attention_pallas.1} parent=1 // pred_fallthru
      _
    // Predicated region
    $region18: #{multihead_attention_pallas.1} parent=1 // pred_check
      _
    $region19: #{multihead_attention_pallas.1} parent=1 // pred_check_branch
      %20 = sbr.rel (0) target = $region21
    $region20: #{multihead_attention_pallas.1} parent=1 // pred_region
      _
    $region21: #{multihead_attention_pallas.1} parent=1 // pred_fallthru
      _
    %v22 = vld [vmem:[%s0] sm:$0xf]
    %v23 = vld [vmem:[%s0 + $0x4] sm:$0xf]
    %v24 = vld [vmem:[%s1] sm:$0xff]
    %v25 = vld [vmem:[%s1 + $0x8] sm:$0xf]
    %v26 = vld [vmem:[%s1 + $0xc] sm:$0xff]
    %v27 = vld [vmem:[%s1 + $0x14] sm:$0xf]
    %v28 = vld [vmem:[%s1 + $0x18] sm:$0xff]
    %v29 = vld [vmem:[%s1 + $0x20] sm:$0xf]
    %v30 = vld [vmem:[%s1 + $0x24] sm:$0xff]
    %v31 = vld [vmem:[%s1 + $0x2c] sm:$0xf]
    %v32 = vld [vmem:[%s1 + $0x30] sm:$0xff]
    %v33 = vld [vmem:[%s1 + $0x38] sm:$0xf]
    %v34 = vld [vmem:[%s1 + $0x3c] sm:$0xff]
    %v35 = vld [vmem:[%s1 + $0x44] sm:$0xf]
    %v36 = vld [vmem:[%s1 + $0x48] sm:$0xff]
    %v37 = vld [vmem:[%s1 + $0x50] sm:$0xf]
    %v38 = vld [vmem:[%s1 + $0x54] sm:$0xff]
    %v39 = vld [vmem:[%s1 + $0x5c] sm:$0xf]
    %v40 = vld [vmem:[%s1 + $0x60] sm:$0xff]
    %v41 = vld [vmem:[%s1 + $0x68] sm:$0xf]
    %v42 = vld [vmem:[%s1 + $0x6c] sm:$0xff]
    %v43 = vld [vmem:[%s1 + $0x74] sm:$0xf]
    %v44 = vld [vmem:[%s1 + $0x78] sm:$0xff]
    %v45 = vld [vmem:[%s1 + $0x80] sm:$0xf]
    %v46 = vld [vmem:[%s1 + $0x84] sm:$0xff]
    %v47 = vld [vmem:[%s1 + $0x8c] sm:$0xf]
    %v48 = vld [vmem:[%s1 + $0x90] sm:$0xff]
    %v49 = vld [vmem:[%s1 + $0x98] sm:$0xf]
    %v50 = vld [vmem:[%s1 + $0x9c] sm:$0xff]
    %v51 = vld [vmem:[%s1 + $0xa4] sm:$0xf]
    %v52 = vld [vmem:[%s1 + $0xa8] sm:$0xff]
    %v53 = vld [vmem:[%s1 + $0xb0] sm:$0xf]
    %v54 = vld [vmem:[%s1 + $0xb4] sm:$0xff]
    %v55 = vld [vmem:[%s1 + $0xbc] sm:$0xf]
    %v56 = vld [vmem:[%s2] sm:$0x7]
    %v58 = vlaneseq
    %v59 = vshrl.u32 %v58, 7
    %v60 = vsub.s32 0, %v59
    %v61 = vrot.slane %v56, %v60
    %v62 = vlaneseq
    %v63 = vshrl.u32 %v62, 7
    %v64 = vsub.s32 1, %v63
    %v65 = vrot.slane %v56, %v64
    %v66 = vlaneseq
    %v67 = vshrl.u32 %v66, 7
    %v68 = vsub.s32 2, %v67
    %v69 = vrot.slane %v56, %v68
    %v75 = vunpack.c.l.b16 %v22
    %v76 = vunpack.c.l.b16 %v23
    %v77 = vpack.c.b16 %v76, %v75
    %v111 = vunpack.c.l.b16 %v24
    %v112 = vunpack.c.h.b16 %v24
    %v113 = vunpack.c.l.b16 %v25
    %v114 = vunpack.c.l.b16 %v26
    %v115 = vunpack.c.h.b16 %v26
    %v116 = vunpack.c.l.b16 %v27
    %v117 = vunpack.c.l.b16 %v28
    %v118 = vunpack.c.h.b16 %v28
    %v119 = vunpack.c.l.b16 %v29
    %v120 = vunpack.c.l.b16 %v30
    %v121 = vunpack.c.h.b16 %v30
    %v122 = vunpack.c.l.b16 %v31
    %v123 = vunpack.c.l.b16 %v32
    %v124 = vunpack.c.h.b16 %v32
    %v125 = vunpack.c.l.b16 %v33
    %v126 = vunpack.c.l.b16 %v34
    %v127 = vunpack.c.h.b16 %v34
    %v128 = vunpack.c.l.b16 %v35
    %v129 = vunpack.c.l.b16 %v36
    %v130 = vunpack.c.h.b16 %v36
    %v131 = vunpack.c.l.b16 %v37
    %v132 = vunpack.c.l.b16 %v38
    %v133 = vunpack.c.h.b16 %v38
    %v134 = vunpack.c.l.b16 %v39
    %v135 = vunpack.c.l.b16 %v40
    %v136 = vunpack.c.h.b16 %v40
    %v137 = vunpack.c.l.b16 %v41
    %v138 = vunpack.c.l.b16 %v42
    %v139 = vunpack.c.h.b16 %v42
    %v140 = vunpack.c.l.b16 %v43
    %v141 = vunpack.c.l.b16 %v44
    %v142 = vunpack.c.h.b16 %v44
    %v143 = vunpack.c.l.b16 %v45
    %v144 = vunpack.c.l.b16 %v46
    %v145 = vunpack.c.h.b16 %v46
    %v146 = vunpack.c.l.b16 %v47
    %v147 = vunpack.c.l.b16 %v48
    %v148 = vunpack.c.h.b16 %v48
    %v149 = vunpack.c.l.b16 %v49
    %v150 = vunpack.c.l.b16 %v50
    %v151 = vunpack.c.h.b16 %v50
    %v152 = vunpack.c.l.b16 %v51
    %v153 = vunpack.c.l.b16 %v52
    %v154 = vunpack.c.h.b16 %v52
    %v155 = vunpack.c.l.b16 %v53
    %v156 = vunpack.c.l.b16 %v54
    %v157 = vunpack.c.h.b16 %v54
    %v158 = vunpack.c.l.b16 %v55
    %v159 = vpack.c.b16 %v114, %v111
    %v160 = vpack.c.b16 %v115, %v112
    %v161 = vpack.c.b16 %v116, %v113
    %v162 = vpack.c.b16 %v120, %v117
    %v163 = vpack.c.b16 %v121, %v118
    %v164 = vpack.c.b16 %v122, %v119
    %v165 = vpack.c.b16 %v126, %v123
    %v166 = vpack.c.b16 %v127, %v124
    %v167 = vpack.c.b16 %v128, %v125
    %v168 = vpack.c.b16 %v132, %v129
    %v169 = vpack.c.b16 %v133, %v130
    %v170 = vpack.c.b16 %v134, %v131
    %v171 = vpack.c.b16 %v138, %v135
    %v172 = vpack.c.b16 %v139, %v136
    %v173 = vpack.c.b16 %v140, %v137
    %v174 = vpack.c.b16 %v144, %v141
    %v175 = vpack.c.b16 %v145, %v142
    %v176 = vpack.c.b16 %v146, %v143
    %v177 = vpack.c.b16 %v150, %v147
    %v178 = vpack.c.b16 %v151, %v148
    %v179 = vpack.c.b16 %v152, %v149
    %v180 = vpack.c.b16 %v156, %v153
    %v181 = vpack.c.b16 %v157, %v154
    %v182 = vpack.c.b16 %v158, %v155
    %207 = vmatprep.subr.bf16.mxu0 %v160
    %208 = vmatpush1.bf16.msra.mxu0 %v159
    %209 = vmatprep.subr.bf16.mxu0 %v163
    %210 = vmatpush1.bf16.msra.mxu0 %v162
    %211 = vmatprep.subr.bf16.mxu0 %v166
    %212 = vmatpush1.bf16.msra.mxu0 %v165
    %213 = vmatprep.subr.bf16.mxu0 %v169
    %214 = vmatpush1.bf16.msra.mxu0 %v168
    %215 = vmatprep.subr.bf16.mxu0 %v172
    %216 = vmatpush1.bf16.msra.mxu0 %v171
    %217 = vmatprep.subr.bf16.mxu0 %v175
    %218 = vmatpush1.bf16.msra.mxu0 %v174
    %219 = vmatprep.subr.bf16.mxu0 %v178
    %220 = vmatpush1.bf16.msra.mxu0 %v177
    %221 = vmatprep.subr.bf16.mxu0 %v181
    %222 = vmatpush1.bf16.msra.mxu0 %v180
    %223 = vmatprep.subr.bf16.mxu0 0
    %224 = vmatpush1.bf16.msra.mxu0 0
    %225 = vmatprep.subr.bf16.mxu0 0
    %226 = vmatpush1.bf16.msra.mxu0 0
    %227 = vmatprep.subr.bf16.mxu0 0
    %228 = vmatpush1.bf16.msra.mxu0 0
    %229 = vmatprep.subr.bf16.mxu0 0
    %230 = vmatpush1.bf16.msra.mxu0 0
    %231 = vmatprep.subr.bf16.mxu0 0
    %232 = vmatpush1.bf16.msra.mxu0 0
    %233 = vmatprep.subr.bf16.mxu0 0
    %234 = vmatpush1.bf16.msra.mxu0 0
    %235 = vmatprep.subr.bf16.mxu0 0
    %236 = vmatpush1.bf16.msra.mxu0 0
    %237 = vmatprep.subr.bf16.mxu0 0
    %238 = vmatpush1.bf16.msra.mxu0 0
    %239 = vmatprep.mubr.bf16.mxu0 0
    %240 = vmatmul.mubr.bf16.gmra.mrb[0].mxu0 %v77
    %v241 = vpop.f32.mrb[0].mxu0
    %v242 = vadd.f32 %v61, %v241
    %v243 = vpop.f32.mrb[0].mxu0
    %v244 = vadd.f32 %v65, %v243
    %v245 = vpop.f32.mrb[0].mxu0
    %v246 = vadd.f32 %v61, %v245
    %v247 = vpop.f32.mrb[0].mxu0
    %v248 = vadd.f32 %v65, %v247
    %249 = vdwg.mxu0
    %250 = vmatprep.subr.bf16.mxu0 0
    %251 = vmatpush1.bf16.msra.mxu0 %v161
    %252 = vmatprep.subr.bf16.mxu0 0
    %253 = vmatpush1.bf16.msra.mxu0 %v164
    %254 = vmatprep.subr.bf16.mxu0 0
    %255 = vmatpush1.bf16.msra.mxu0 %v167
    %256 = vmatprep.subr.bf16.mxu0 0
    %257 = vmatpush1.bf16.msra.mxu0 %v170
    %258 = vmatprep.subr.bf16.mxu0 0
    %259 = vmatpush1.bf16.msra.mxu0 %v173
    %260 = vmatprep.subr.bf16.mxu0 0
    %261 = vmatpush1.bf16.msra.mxu0 %v176
    %262 = vmatprep.subr.bf16.mxu0 0
    %263 = vmatpush1.bf16.msra.mxu0 %v179
    %264 = vmatprep.subr.bf16.mxu0 0
    %265 = vmatpush1.bf16.msra.mxu0 %v182
    %266 = vmatprep.subr.bf16.mxu0 0
    %267 = vmatpush1.bf16.msra.mxu0 0
    %268 = vmatprep.subr.bf16.mxu0 0
    %269 = vmatpush1.bf16.msra.mxu0 0
    %270 = vmatprep.subr.bf16.mxu0 0
    %271 = vmatpush1.bf16.msra.mxu0 0
    %272 = vmatprep.subr.bf16.mxu0 0
    %273 = vmatpush1.bf16.msra.mxu0 0
    %274 = vmatprep.subr.bf16.mxu0 0
    %275 = vmatpush1.bf16.msra.mxu0 0
    %276 = vmatprep.subr.bf16.mxu0 0
    %277 = vmatpush1.bf16.msra.mxu0 0
    %278 = vmatprep.subr.bf16.mxu0 0
    %279 = vmatpush1.bf16.msra.mxu0 0
    %280 = vmatprep.subr.bf16.mxu0 0
    %281 = vmatpush1.bf16.msra.mxu0 0
    %282 = vmatprep.mubr.bf16.mxu0 0
    %283 = vmatmul.mubr.bf16.gmra.mrb[0].mxu0 %v77
    %v284 = vpop.f32.mrb[0].mxu0
    %v285 = vadd.f32 %v69, %v284
    %v286 = vpop.f32.mrb[0].mxu0
    %v287 = vpop.f32.mrb[0].mxu0
    %v288 = vadd.f32 %v69, %v287
    %v289 = vpop.f32.mrb[0].mxu0
    %290 = vdwg.mxu0
    %293 = vrot.lane.b32.xlu0 %v242, 112
    %v294 = vpop.permute.xlu0 %293
    %295 = vrot.lane.b32.xlu0 %v246, 112
    %v296 = vpop.permute.xlu0 %295
    %299 = vrot.lane.b32.xlu0 %v242, 96
    %v300 = vpop.permute.xlu0 %299
    %301 = vrot.lane.b32.xlu0 %v246, 96
    %v302 = vpop.permute.xlu0 %301
    %305 = vrot.lane.b32.xlu0 %v242, 80
    %v306 = vpop.permute.xlu0 %305
    %307 = vrot.lane.b32.xlu0 %v246, 80
    %v308 = vpop.permute.xlu0 %307
    %311 = vrot.lane.b32.xlu0 %v242, 64
    %v312 = vpop.permute.xlu0 %311
    %313 = vrot.lane.b32.xlu0 %v246, 64
    %v314 = vpop.permute.xlu0 %313
    %317 = vrot.lane.b32.xlu0 %v242, 48
    %v318 = vpop.permute.xlu0 %317
    %319 = vrot.lane.b32.xlu0 %v246, 48
    %v320 = vpop.permute.xlu0 %319
    %323 = vrot.lane.b32.xlu0 %v242, 32
    %v324 = vpop.permute.xlu0 %323
    %325 = vrot.lane.b32.xlu0 %v246, 32
    %v326 = vpop.permute.xlu0 %325
    %329 = vrot.lane.b32.xlu0 %v242, 16
    %v330 = vpop.permute.xlu0 %329
    %331 = vrot.lane.b32.xlu0 %v246, 16
    %v332 = vpop.permute.xlu0 %331
    %v335 = vpack.c.bf16 %v242, %v242
    %v336 = vpack.c.bf16 %v246, %v246
    %v337 = vpack.c.bf16 %v294, %v294
    %v338 = vpack.c.bf16 %v296, %v296
    %v339 = vpack.c.bf16 %v300, %v300
    %v340 = vpack.c.bf16 %v302, %v302
    %v341 = vpack.c.bf16 %v306, %v306
    %v342 = vpack.c.bf16 %v308, %v308
    %v343 = vpack.c.bf16 %v312, %v312
    %v344 = vpack.c.bf16 %v314, %v314
    %v345 = vpack.c.bf16 %v318, %v318
    %v346 = vpack.c.bf16 %v320, %v320
    %v347 = vpack.c.bf16 %v324, %v324
    %v348 = vpack.c.bf16 %v326, %v326
    %v349 = vpack.c.bf16 %v330, %v330
    %v350 = vpack.c.bf16 %v332, %v332
    %353 = vrot.lane.b32.xlu0 %v244, 112
    %v354 = vpop.permute.xlu0 %353
    %355 = vrot.lane.b32.xlu0 %v248, 112
    %v356 = vpop.permute.xlu0 %355
    %359 = vrot.lane.b32.xlu0 %v244, 96
    %v360 = vpop.permute.xlu0 %359
    %361 = vrot.lane.b32.xlu0 %v248, 96
    %v362 = vpop.permute.xlu0 %361
    %365 = vrot.lane.b32.xlu0 %v244, 80
    %v366 = vpop.permute.xlu0 %365
    %367 = vrot.lane.b32.xlu0 %v248, 80
    %v368 = vpop.permute.xlu0 %367
    %371 = vrot.lane.b32.xlu0 %v244, 64
    %v372 = vpop.permute.xlu0 %371
    %373 = vrot.lane.b32.xlu0 %v248, 64
    %v374 = vpop.permute.xlu0 %373
    %377 = vrot.lane.b32.xlu0 %v244, 48
    %v378 = vpop.permute.xlu0 %377
    %379 = vrot.lane.b32.xlu0 %v248, 48
    %v380 = vpop.permute.xlu0 %379
    %383 = vrot.lane.b32.xlu0 %v244, 32
    %v384 = vpop.permute.xlu0 %383
    %385 = vrot.lane.b32.xlu0 %v248, 32
    %v386 = vpop.permute.xlu0 %385
    %389 = vrot.lane.b32.xlu0 %v244, 16
    %v390 = vpop.permute.xlu0 %389
    %391 = vrot.lane.b32.xlu0 %v248, 16
    %v392 = vpop.permute.xlu0 %391
    %v395 = vpack.c.bf16 %v244, %v244
    %v396 = vpack.c.bf16 %v248, %v248
    %v397 = vpack.c.bf16 %v354, %v354
    %v398 = vpack.c.bf16 %v356, %v356
    %v399 = vpack.c.bf16 %v360, %v360
    %v400 = vpack.c.bf16 %v362, %v362
    %v401 = vpack.c.bf16 %v366, %v366
    %v402 = vpack.c.bf16 %v368, %v368
    %v403 = vpack.c.bf16 %v372, %v372
    %v404 = vpack.c.bf16 %v374, %v374
    %v405 = vpack.c.bf16 %v378, %v378
    %v406 = vpack.c.bf16 %v380, %v380
    %v407 = vpack.c.bf16 %v384, %v384
    %v408 = vpack.c.bf16 %v386, %v386
    %v409 = vpack.c.bf16 %v390, %v390
    %v410 = vpack.c.bf16 %v392, %v392
    %413 = vrot.lane.b32.xlu0 %v285, 112
    %v414 = vpop.permute.xlu0 %413
    %415 = vrot.lane.b32.xlu0 %v288, 112
    %v416 = vpop.permute.xlu0 %415
    %419 = vrot.lane.b32.xlu0 %v285, 96
    %v420 = vpop.permute.xlu0 %419
    %421 = vrot.lane.b32.xlu0 %v288, 96
    %v422 = vpop.permute.xlu0 %421
    %425 = vrot.lane.b32.xlu0 %v285, 80
    %v426 = vpop.permute.xlu0 %425
    %427 = vrot.lane.b32.xlu0 %v288, 80
    %v428 = vpop.permute.xlu0 %427
    %431 = vrot.lane.b32.xlu0 %v285, 64
    %v432 = vpop.permute.xlu0 %431
    %433 = vrot.lane.b32.xlu0 %v288, 64
    %v434 = vpop.permute.xlu0 %433
    %437 = vrot.lane.b32.xlu0 %v285, 48
    %v438 = vpop.permute.xlu0 %437
    %439 = vrot.lane.b32.xlu0 %v288, 48
    %v440 = vpop.permute.xlu0 %439
    %443 = vrot.lane.b32.xlu0 %v285, 32
    %v444 = vpop.permute.xlu0 %443
    %445 = vrot.lane.b32.xlu0 %v288, 32
    %v446 = vpop.permute.xlu0 %445
    %449 = vrot.lane.b32.xlu0 %v285, 16
    %v450 = vpop.permute.xlu0 %449
    %451 = vrot.lane.b32.xlu0 %v288, 16
    %v452 = vpop.permute.xlu0 %451
    %v455 = vpack.c.bf16 %v285, %v285
    %v456 = vpack.c.bf16 %v288, %v288
    %v457 = vpack.c.bf16 %v414, %v414
    %v458 = vpack.c.bf16 %v416, %v416
    %v459 = vpack.c.bf16 %v420, %v420
    %v460 = vpack.c.bf16 %v422, %v422
    %v461 = vpack.c.bf16 %v426, %v426
    %v462 = vpack.c.bf16 %v428, %v428
    %v463 = vpack.c.bf16 %v432, %v432
    %v464 = vpack.c.bf16 %v434, %v434
    %v465 = vpack.c.bf16 %v438, %v438
    %v466 = vpack.c.bf16 %v440, %v440
    %v467 = vpack.c.bf16 %v444, %v444
    %v468 = vpack.c.bf16 %v446, %v446
    %v469 = vpack.c.bf16 %v450, %v450
    %v470 = vpack.c.bf16 %v452, %v452
    %vm471 = vcmask 130048
    %v473 = vsel %vm471, %v335, 0
    %v476 = vsel %vm471, %v395, 0
    %478 = vmatprep.subr.bf16.mxu0 0
    %479 = vmatpush1.bf16.xpose.msra.mxu0 %v476
    %480 = vmatprep.subr.bf16.mxu0 0
    %481 = vmatpush1.bf16.xpose.msra.mxu0 0
    %482 = vmatprep.subr.bf16.mxu0 0
    %483 = vmatpush1.bf16.xpose.msra.mxu0 0
    %484 = vmatprep.subr.bf16.mxu0 0
    %485 = vmatpush1.bf16.xpose.msra.mxu0 0
    %486 = vmatprep.subr.bf16.mxu0 0
    %487 = vmatpush1.bf16.xpose.msra.mxu0 0
    %488 = vmatprep.subr.bf16.mxu0 0
    %489 = vmatpush1.bf16.xpose.msra.mxu0 0
    %490 = vmatprep.subr.bf16.mxu0 0
    %491 = vmatpush1.bf16.xpose.msra.mxu0 0
    %492 = vmatprep.subr.bf16.mxu0 0
    %493 = vmatpush1.bf16.xpose.msra.mxu0 0
    %494 = vmatprep.subr.bf16.mxu0 0
    %495 = vmatpush1.bf16.xpose.msra.mxu0 0
    %496 = vmatprep.subr.bf16.mxu0 0
    %497 = vmatpush1.bf16.xpose.msra.mxu0 0
    %498 = vmatprep.subr.bf16.mxu0 0
    %499 = vmatpush1.bf16.xpose.msra.mxu0 0
    %500 = vmatprep.subr.bf16.mxu0 0
    %501 = vmatpush1.bf16.xpose.msra.mxu0 0
    %502 = vmatprep.subr.bf16.mxu0 0
    %503 = vmatpush1.bf16.xpose.msra.mxu0 0
    %504 = vmatprep.subr.bf16.mxu0 0
    %505 = vmatpush1.bf16.xpose.msra.mxu0 0
    %506 = vmatprep.subr.bf16.mxu0 0
    %507 = vmatpush1.bf16.xpose.msra.mxu0 0
    %508 = vmatprep.subr.bf16.mxu0 0
    %509 = vmatpush1.bf16.xpose.msra.mxu0 0
    %510 = vmatprep.mubr.bf16.mxu0 0
    %511 = vmatmul.mubr.bf16.gmra.mrb[0].mxu0 %v473
    %v512 = vpop.f32.mrb[0].mxu0
    %v513 = vadd.f32 0.0, %v512
    %v514 = vpop.f32.mrb[0].mxu0
    %v515 = vpop.f32.mrb[0].mxu0
    %v516 = vpop.f32.mrb[0].mxu0
    %517 = vdwg.mxu0
    %v519 = vsel %vm471, %v336, 0
    %v522 = vsel %vm471, %v396, 0
    %524 = vmatprep.subr.bf16.mxu0 0
    %525 = vmatpush1.bf16.xpose.msra.mxu0 %v522
    %526 = vmatprep.subr.bf16.mxu0 0
    %527 = vmatpush1.bf16.xpose.msra.mxu0 0
    %528 = vmatprep.subr.bf16.mxu0 0
    %529 = vmatpush1.bf16.xpose.msra.mxu0 0
    %530 = vmatprep.subr.bf16.mxu0 0
    %531 = vmatpush1.bf16.xpose.msra.mxu0 0
    %532 = vmatprep.subr.bf16.mxu0 0
    %533 = vmatpush1.bf16.xpose.msra.mxu0 0
    %534 = vmatprep.subr.bf16.mxu0 0
    %535 = vmatpush1.bf16.xpose.msra.mxu0 0
    %536 = vmatprep.subr.bf16.mxu0 0
    %537 = vmatpush1.bf16.xpose.msra.mxu0 0
    %538 = vmatprep.subr.bf16.mxu0 0
    %539 = vmatpush1.bf16.xpose.msra.mxu0 0
    %540 = vmatprep.subr.bf16.mxu0 0
    %541 = vmatpush1.bf16.xpose.msra.mxu0 0
    %542 = vmatprep.subr.bf16.mxu0 0
    %543 = vmatpush1.bf16.xpose.msra.mxu0 0
    %544 = vmatprep.subr.bf16.mxu0 0
    %545 = vmatpush1.bf16.xpose.msra.mxu0 0
    %546 = vmatprep.subr.bf16.mxu0 0
    %547 = vmatpush1.bf16.xpose.msra.mxu0 0
    %548 = vmatprep.subr.bf16.mxu0 0
    %549 = vmatpush1.bf16.xpose.msra.mxu0 0
    %550 = vmatprep.subr.bf16.mxu0 0
    %551 = vmatpush1.bf16.xpose.msra.mxu0 0
    %552 = vmatprep.subr.bf16.mxu0 0
    %553 = vmatpush1.bf16.xpose.msra.mxu0 0
    %554 = vmatprep.subr.bf16.mxu0 0
    %555 = vmatpush1.bf16.xpose.msra.mxu0 0
    %556 = vmatprep.mubr.bf16.mxu0 0
    %557 = vmatmul.mubr.bf16.gmra.mrb[0].mxu0 %v519
    %v558 = vpop.f32.mrb[0].mxu0
    %v559 = vadd.f32 0.0, %v558
    %v560 = vpop.f32.mrb[0].mxu0
    %v561 = vpop.f32.mrb[0].mxu0
    %v562 = vpop.f32.mrb[0].mxu0
    %563 = vdwg.mxu0
    %v565 = vsel %vm471, %v337, 0
    %v568 = vsel %vm471, %v397, 0
    %570 = vmatprep.subr.bf16.mxu0 0
    %571 = vmatpush1.bf16.xpose.msra.mxu0 %v568
    %572 = vmatprep.subr.bf16.mxu0 0
    %573 = vmatpush1.bf16.xpose.msra.mxu0 0
    %574 = vmatprep.subr.bf16.mxu0 0
    %575 = vmatpush1.bf16.xpose.msra.mxu0 0
    %576 = vmatprep.subr.bf16.mxu0 0
    %577 = vmatpush1.bf16.xpose.msra.mxu0 0
    %578 = vmatprep.subr.bf16.mxu0 0
    %579 = vmatpush1.bf16.xpose.msra.mxu0 0
    %580 = vmatprep.subr.bf16.mxu0 0
    %581 = vmatpush1.bf16.xpose.msra.mxu0 0
    %582 = vmatprep.subr.bf16.mxu0 0
    %583 = vmatpush1.bf16.xpose.msra.mxu0 0
    %584 = vmatprep.subr.bf16.mxu0 0
    %585 = vmatpush1.bf16.xpose.msra.mxu0 0
    %586 = vmatprep.subr.bf16.mxu0 0
    %587 = vmatpush1.bf16.xpose.msra.mxu0 0
    %588 = vmatprep.subr.bf16.mxu0 0
    %589 = vmatpush1.bf16.xpose.msra.mxu0 0
    %590 = vmatprep.subr.bf16.mxu0 0
    %591 = vmatpush1.bf16.xpose.msra.mxu0 0
    %592 = vmatprep.subr.bf16.mxu0 0
    %593 = vmatpush1.bf16.xpose.msra.mxu0 0
    %594 = vmatprep.subr.bf16.mxu0 0
    %595 = vmatpush1.bf16.xpose.msra.mxu0 0
    %596 = vmatprep.subr.bf16.mxu0 0
    %597 = vmatpush1.bf16.xpose.msra.mxu0 0
    %598 = vmatprep.subr.bf16.mxu0 0
    %599 = vmatpush1.bf16.xpose.msra.mxu0 0
    %600 = vmatprep.subr.bf16.mxu0 0
    %601 = vmatpush1.bf16.xpose.msra.mxu0 0
    %602 = vmatprep.mubr.bf16.mxu0 0
    %603 = vmatmul.mubr.bf16.gmra.mrb[0].mxu0 %v565
    %v604 = vpop.f32.mrb[0].mxu0
    %v605 = vadd.f32 0.0, %v604
    %v606 = vpop.f32.mrb[0].mxu0
    %v607 = vpop.f32.mrb[0].mxu0
    %v608 = vpop.f32.mrb[0].mxu0
    %609 = vdwg.mxu0
    %v611 = vsel %vm471, %v338, 0
    %v614 = vsel %vm471, %v398, 0
    %616 = vmatprep.subr.bf16.mxu0 0
    %617 = vmatpush1.bf16.xpose.msra.mxu0 %v614
    %618 = vmatprep.subr.bf16.mxu0 0
    %619 = vmatpush1.bf16.xpose.msra.mxu0 0
    %620 = vmatprep.subr.bf16.mxu0 0
    %621 = vmatpush1.bf16.xpose.msra.mxu0 0
    %622 = vmatprep.subr.bf16.mxu0 0
    %623 = vmatpush1.bf16.xpose.msra.mxu0 0
    %624 = vmatprep.subr.bf16.mxu0 0
    %625 = vmatpush1.bf16.xpose.msra.mxu0 0
    %626 = vmatprep.subr.bf16.mxu0 0
    %627 = vmatpush1.bf16.xpose.msra.mxu0 0
    %628 = vmatprep.subr.bf16.mxu0 0
    %629 = vmatpush1.bf16.xpose.msra.mxu0 0
    %630 = vmatprep.subr.bf16.mxu0 0
    %631 = vmatpush1.bf16.xpose.msra.mxu0 0
    %632 = vmatprep.subr.bf16.mxu0 0
    %633 = vmatpush1.bf16.xpose.msra.mxu0 0
    %634 = vmatprep.subr.bf16.mxu0 0
    %635 = vmatpush1.bf16.xpose.msra.mxu0 0
    %636 = vmatprep.subr.bf16.mxu0 0
    %637 = vmatpush1.bf16.xpose.msra.mxu0 0
    %638 = vmatprep.subr.bf16.mxu0 0
    %639 = vmatpush1.bf16.xpose.msra.mxu0 0
    %640 = vmatprep.subr.bf16.mxu0 0
    %641 = vmatpush1.bf16.xpose.msra.mxu0 0
    %642 = vmatprep.subr.bf16.mxu0 0
    %643 = vmatpush1.bf16.xpose.msra.mxu0 0
    %644 = vmatprep.subr.bf16.mxu0 0
    %645 = vmatpush1.bf16.xpose.msra.mxu0 0
    %646 = vmatprep.subr.bf16.mxu0 0
    %647 = vmatpush1.bf16.xpose.msra.mxu0 0
    %648 = vmatprep.mubr.bf16.mxu0 0
    %649 = vmatmul.mubr.bf16.gmra.mrb[0].mxu0 %v611
    %v650 = vpop.f32.mrb[0].mxu0
    %v651 = vadd.f32 0.0, %v650
    %v652 = vpop.f32.mrb[0].mxu0
    %v653 = vpop.f32.mrb[0].mxu0
    %v654 = vpop.f32.mrb[0].mxu0
    %655 = vdwg.mxu0
    %v657 = vsel %vm471, %v339, 0
    %v660 = vsel %vm471, %v399, 0
    %662 = vmatprep.subr.bf16.mxu0 0
    %663 = vmatpush1.bf16.xpose.msra.mxu0 %v660
    %664 = vmatprep.subr.bf16.mxu0 0
    %665 = vmatpush1.bf16.xpose.msra.mxu0 0
    %666 = vmatprep.subr.bf16.mxu0 0
    %667 = vmatpush1.bf16.xpose.msra.mxu0 0
    %668 = vmatprep.subr.bf16.mxu0 0
    %669 = vmatpush1.bf16.xpose.msra.mxu0 0
    %670 = vmatprep.subr.bf16.mxu0 0
    %671 = vmatpush1.bf16.xpose.msra.mxu0 0
    %672 = vmatprep.subr.bf16.mxu0 0
    %673 = vmatpush1.bf16.xpose.msra.mxu0 0
    %674 = vmatprep.subr.bf16.mxu0 0
    %675 = vmatpush1.bf16.xpose.msra.mxu0 0
    %676 = vmatprep.subr.bf16.mxu0 0
    %677 = vmatpush1.bf16.xpose.msra.mxu0 0
    %678 = vmatprep.subr.bf16.mxu0 0
    %679 = vmatpush1.bf16.xpose.msra.mxu0 0
    %680 = vmatprep.subr.bf16.mxu0 0
    %681 = vmatpush1.bf16.xpose.msra.mxu0 0
    %682 = vmatprep.subr.bf16.mxu0 0
    %683 = vmatpush1.bf16.xpose.msra.mxu0 0
    %684 = vmatprep.subr.bf16.mxu0 0
    %685 = vmatpush1.bf16.xpose.msra.mxu0 0
    %686 = vmatprep.subr.bf16.mxu0 0
    %687 = vmatpush1.bf16.xpose.msra.mxu0 0
    %688 = vmatprep.subr.bf16.mxu0 0
    %689 = vmatpush1.bf16.xpose.msra.mxu0 0
    %690 = vmatprep.subr.bf16.mxu0 0
    %691 = vmatpush1.bf16.xpose.msra.mxu0 0
    %692 = vmatprep.subr.bf16.mxu0 0
    %693 = vmatpush1.bf16.xpose.msra.mxu0 0
    %694 = vmatprep.mubr.bf16.mxu0 0
    %695 = vmatmul.mubr.bf16.gmra.mrb[0].mxu0 %v657
    %v696 = vpop.f32.mrb[0].mxu0
    %v697 = vadd.f32 0.0, %v696
    %v698 = vpop.f32.mrb[0].mxu0
    %v699 = vpop.f32.mrb[0].mxu0
    %v700 = vpop.f32.mrb[0].mxu0
    %701 = vdwg.mxu0
    %v703 = vsel %vm471, %v340, 0
    %v706 = vsel %vm471, %v400, 0
    %708 = vmatprep.subr.bf16.mxu0 0
    %709 = vmatpush1.bf16.xpose.msra.mxu0 %v706
    %710 = vmatprep.subr.bf16.mxu0 0
    %711 = vmatpush1.bf16.xpose.msra.mxu0 0
    %712 = vmatprep.subr.bf16.mxu0 0
    %713 = vmatpush1.bf16.xpose.msra.mxu0 0
    %714 = vmatprep.subr.bf16.mxu0 0
    %715 = vmatpush1.bf16.xpose.msra.mxu0 0
    %716 = vmatprep.subr.bf16.mxu0 0
    %717 = vmatpush1.bf16.xpose.msra.mxu0 0
    %718 = vmatprep.subr.bf16.mxu0 0
    %719 = vmatpush1.bf16.xpose.msra.mxu0 0
    %720 = vmatprep.subr.bf16.mxu0 0
    %721 = vmatpush1.bf16.xpose.msra.mxu0 0
    %722 = vmatprep.subr.bf16.mxu0 0
    %723 = vmatpush1.bf16.xpose.msra.mxu0 0
    %724 = vmatprep.subr.bf16.mxu0 0
    %725 = vmatpush1.bf16.xpose.msra.mxu0 0
    %726 = vmatprep.subr.bf16.mxu0 0
    %727 = vmatpush1.bf16.xpose.msra.mxu0 0
    %728 = vmatprep.subr.bf16.mxu0 0
    %729 = vmatpush1.bf16.xpose.msra.mxu0 0
    %730 = vmatprep.subr.bf16.mxu0 0
    %731 = vmatpush1.bf16.xpose.msra.mxu0 0
    %732 = vmatprep.subr.bf16.mxu0 0
    %733 = vmatpush1.bf16.xpose.msra.mxu0 0
    %734 = vmatprep.subr.bf16.mxu0 0
    %735 = vmatpush1.bf16.xpose.msra.mxu0 0
    %736 = vmatprep.subr.bf16.mxu0 0
    %737 = vmatpush1.bf16.xpose.msra.mxu0 0
    %738 = vmatprep.subr.bf16.mxu0 0
    %739 = vmatpush1.bf16.xpose.msra.mxu0 0
    %740 = vmatprep.mubr.bf16.mxu0 0
    %741 = vmatmul.mubr.bf16.gmra.mrb[0].mxu0 %v703
    %v742 = vpop.f32.mrb[0].mxu0
    %v743 = vadd.f32 0.0, %v742
    %v744 = vpop.f32.mrb[0].mxu0
    %v745 = vpop.f32.mrb[0].mxu0
    %v746 = vpop.f32.mrb[0].mxu0
    %747 = vdwg.mxu0
    %v749 = vsel %vm471, %v341, 0
    %v752 = vsel %vm471, %v401, 0
    %754 = vmatprep.subr.bf16.mxu0 0
    %755 = vmatpush1.bf16.xpose.msra.mxu0 %v752
    %756 = vmatprep.subr.bf16.mxu0 0
    %757 = vmatpush1.bf16.xpose.msra.mxu0 0
    %758 = vmatprep.subr.bf16.mxu0 0
    %759 = vmatpush1.bf16.xpose.msra.mxu0 0
    %760 = vmatprep.subr.bf16.mxu0 0
    %761 = vmatpush1.bf16.xpose.msra.mxu0 0
    %762 = vmatprep.subr.bf16.mxu0 0
    %763 = vmatpush1.bf16.xpose.msra.mxu0 0
    %764 = vmatprep.subr.bf16.mxu0 0
    %765 = vmatpush1.bf16.xpose.msra.mxu0 0
    %766 = vmatprep.subr.bf16.mxu0 0
    %767 = vmatpush1.bf16.xpose.msra.mxu0 0
    %768 = vmatprep.subr.bf16.mxu0 0
    %769 = vmatpush1.bf16.xpose.msra.mxu0 0
    %770 = vmatprep.subr.bf16.mxu0 0
    %771 = vmatpush1.bf16.xpose.msra.mxu0 0
    %772 = vmatprep.subr.bf16.mxu0 0
    %773 = vmatpush1.bf16.xpose.msra.mxu0 0
    %774 = vmatprep.subr.bf16.mxu0 0
    %775 = vmatpush1.bf16.xpose.msra.mxu0 0
    %776 = vmatprep.subr.bf16.mxu0 0
    %777 = vmatpush1.bf16.xpose.msra.mxu0 0
    %778 = vmatprep.subr.bf16.mxu0 0
    %779 = vmatpush1.bf16.xpose.msra.mxu0 0
    %780 = vmatprep.subr.bf16.mxu0 0
    %781 = vmatpush1.bf16.xpose.msra.mxu0 0
    %782 = vmatprep.subr.bf16.mxu0 0
    %783 = vmatpush1.bf16.xpose.msra.mxu0 0
    %784 = vmatprep.subr.bf16.mxu0 0
    %785 = vmatpush1.bf16.xpose.msra.mxu0 0
    %786 = vmatprep.mubr.bf16.mxu0 0
    %787 = vmatmul.mubr.bf16.gmra.mrb[0].mxu0 %v749
    %v788 = vpop.f32.mrb[0].mxu0
    %v789 = vadd.f32 0.0, %v788
    %v790 = vpop.f32.mrb[0].mxu0
    %v791 = vpop.f32.mrb[0].mxu0
    %v792 = vpop.f32.mrb[0].mxu0
    %793 = vdwg.mxu0
    %v795 = vsel %vm471, %v342, 0
    %v798 = vsel %vm471, %v402, 0
    %800 = vmatprep.subr.bf16.mxu0 0
    %801 = vmatpush1.bf16.xpose.msra.mxu0 %v798
    %802 = vmatprep.subr.bf16.mxu0 0
    %803 = vmatpush1.bf16.xpose.msra.mxu0 0
    %804 = vmatprep.subr.bf16.mxu0 0
    %805 = vmatpush1.bf16.xpose.msra.mxu0 0
    %806 = vmatprep.subr.bf16.mxu0 0
    %807 = vmatpush1.bf16.xpose.msra.mxu0 0
    %808 = vmatprep.subr.bf16.mxu0 0
    %809 = vmatpush1.bf16.xpose.msra.mxu0 0
    %810 = vmatprep.subr.bf16.mxu0 0
    %811 = vmatpush1.bf16.xpose.msra.mxu0 0
    %812 = vmatprep.subr.bf16.mxu0 0
    %813 = vmatpush1.bf16.xpose.msra.mxu0 0
    %814 = vmatprep.subr.bf16.mxu0 0
    %815 = vmatpush1.bf16.xpose.msra.mxu0 0
    %816 = vmatprep.subr.bf16.mxu0 0
    %817 = vmatpush1.bf16.xpose.msra.mxu0 0
    %818 = vmatprep.subr.bf16.mxu0 0
    %819 = vmatpush1.bf16.xpose.msra.mxu0 0
    %820 = vmatprep.subr.bf16.mxu0 0
    %821 = vmatpush1.bf16.xpose.msra.mxu0 0
    %822 = vmatprep.subr.bf16.mxu0 0
    %823 = vmatpush1.bf16.xpose.msra.mxu0 0
    %824 = vmatprep.subr.bf16.mxu0 0
    %825 = vmatpush1.bf16.xpose.msra.mxu0 0
    %826 = vmatprep.subr.bf16.mxu0 0
    %827 = vmatpush1.bf16.xpose.msra.mxu0 0
    %828 = vmatprep.subr.bf16.mxu0 0
    %829 = vmatpush1.bf16.xpose.msra.mxu0 0
    %830 = vmatprep.subr.bf16.mxu0 0
    %831 = vmatpush1.bf16.xpose.msra.mxu0 0
    %832 = vmatprep.mubr.bf16.mxu0 0
    %833 = vmatmul.mubr.bf16.gmra.mrb[0].mxu0 %v795
    %v834 = vpop.f32.mrb[0].mxu0
    %v835 = vadd.f32 0.0, %v834
    %v836 = vpop.f32.mrb[0].mxu0
    %v837 = vpop.f32.mrb[0].mxu0
    %v838 = vpop.f32.mrb[0].mxu0
    %839 = vdwg.mxu0
    %v841 = vsel %vm471, %v343, 0
    %v844 = vsel %vm471, %v403, 0
    %846 = vmatprep.subr.bf16.mxu0 0
    %847 = vmatpush1.bf16.xpose.msra.mxu0 %v844
    %848 = vmatprep.subr.bf16.mxu0 0
    %849 = vmatpush1.bf16.xpose.msra.mxu0 0
    %850 = vmatprep.subr.bf16.mxu0 0
    %851 = vmatpush1.bf16.xpose.msra.mxu0 0
    %852 = vmatprep.subr.bf16.mxu0 0
    %853 = vmatpush1.bf16.xpose.msra.mxu0 0
    %854 = vmatprep.subr.bf16.mxu0 0
    %855 = vmatpush1.bf16.xpose.msra.mxu0 0
    %856 = vmatprep.subr.bf16.mxu0 0
    %857 = vmatpush1.bf16.xpose.msra.mxu0 0
    %858 = vmatprep.subr.bf16.mxu0 0
    %859 = vmatpush1.bf16.xpose.msra.mxu0 0
    %860 = vmatprep.subr.bf16.mxu0 0
    %861 = vmatpush1.bf16.xpose.msra.mxu0 0
    %862 = vmatprep.subr.bf16.mxu0 0
    %863 = vmatpush1.bf16.xpose.msra.mxu0 0
    %864 = vmatprep.subr.bf16.mxu0 0
    %865 = vmatpush1.bf16.xpose.msra.mxu0 0
    %866 = vmatprep.subr.bf16.mxu0 0
    %867 = vmatpush1.bf16.xpose.msra.mxu0 0
    %868 = vmatprep.subr.bf16.mxu0 0
    %869 = vmatpush1.bf16.xpose.msra.mxu0 0
    %870 = vmatprep.subr.bf16.mxu0 0
    %871 = vmatpush1.bf16.xpose.msra.mxu0 0
    %872 = vmatprep.subr.bf16.mxu0 0
    %873 = vmatpush1.bf16.xpose.msra.mxu0 0
    %874 = vmatprep.subr.bf16.mxu0 0
    %875 = vmatpush1.bf16.xpose.msra.mxu0 0
    %876 = vmatprep.subr.bf16.mxu0 0
    %877 = vmatpush1.bf16.xpose.msra.mxu0 0
    %878 = vmatprep.mubr.bf16.mxu0 0
    %879 = vmatmul.mubr.bf16.gmra.mrb[0].mxu0 %v841
    %v880 = vpop.f32.mrb[0].mxu0
    %v881 = vadd.f32 0.0, %v880
    %v882 = vpop.f32.mrb[0].mxu0
    %v883 = vpop.f32.mrb[0].mxu0
    %v884 = vpop.f32.mrb[0].mxu0
    %885 = vdwg.mxu0
    %v887 = vsel %vm471, %v344, 0
    %v890 = vsel %vm471, %v404, 0
    %892 = vmatprep.subr.bf16.mxu0 0
    %893 = vmatpush1.bf16.xpose.msra.mxu0 %v890
    %894 = vmatprep.subr.bf16.mxu0 0
    %895 = vmatpush1.bf16.xpose.msra.mxu0 0
    %896 = vmatprep.subr.bf16.mxu0 0
    %897 = vmatpush1.bf16.xpose.msra.mxu0 0
    %898 = vmatprep.subr.bf16.mxu0 0
    %899 = vmatpush1.bf16.xpose.msra.mxu0 0
    %900 = vmatprep.subr.bf16.mxu0 0
    %901 = vmatpush1.bf16.xpose.msra.mxu0 0
    %902 = vmatprep.subr.bf16.mxu0 0
    %903 = vmatpush1.bf16.xpose.msra.mxu0 0
    %904 = vmatprep.subr.bf16.mxu0 0
    %905 = vmatpush1.bf16.xpose.msra.mxu0 0
    %906 = vmatprep.subr.bf16.mxu0 0
    %907 = vmatpush1.bf16.xpose.msra.mxu0 0
    %908 = vmatprep.subr.bf16.mxu0 0
    %909 = vmatpush1.bf16.xpose.msra.mxu0 0
    %910 = vmatprep.subr.bf16.mxu0 0
    %911 = vmatpush1.bf16.xpose.msra.mxu0 0
    %912 = vmatprep.subr.bf16.mxu0 0
    %913 = vmatpush1.bf16.xpose.msra.mxu0 0
    %914 = vmatprep.subr.bf16.mxu0 0
    %915 = vmatpush1.bf16.xpose.msra.mxu0 0
    %916 = vmatprep.subr.bf16.mxu0 0
    %917 = vmatpush1.bf16.xpose.msra.mxu0 0
    %918 = vmatprep.subr.bf16.mxu0 0
    %919 = vmatpush1.bf16.xpose.msra.mxu0 0
    %920 = vmatprep.subr.bf16.mxu0 0
    %921 = vmatpush1.bf16.xpose.msra.mxu0 0
    %922 = vmatprep.subr.bf16.mxu0 0
    %923 = vmatpush1.bf16.xpose.msra.mxu0 0
    %924 = vmatprep.mubr.bf16.mxu0 0
    %925 = vmatmul.mubr.bf16.gmra.mrb[0].mxu0 %v887
    %v926 = vpop.f32.mrb[0].mxu0
    %v927 = vadd.f32 0.0, %v926
    %v928 = vpop.f32.mrb[0].mxu0
    %v929 = vpop.f32.mrb[0].mxu0
    %v930 = vpop.f32.mrb[0].mxu0
    %931 = vdwg.mxu0
    %v933 = vsel %vm471, %v345, 0
    %v936 = vsel %vm471, %v405, 0
    %938 = vmatprep.subr.bf16.mxu0 0
    %939 = vmatpush1.bf16.xpose.msra.mxu0 %v936
    %940 = vmatprep.subr.bf16.mxu0 0
    %941 = vmatpush1.bf16.xpose.msra.mxu0 0
    %942 = vmatprep.subr.bf16.mxu0 0
    %943 = vmatpush1.bf16.xpose.msra.mxu0 0
    %944 = vmatprep.subr.bf16.mxu0 0
    %945 = vmatpush1.bf16.xpose.msra.mxu0 0
    %946 = vmatprep.subr.bf16.mxu0 0
    %947 = vmatpush1.bf16.xpose.msra.mxu0 0
    %948 = vmatprep.subr.bf16.mxu0 0
    %949 = vmatpush1.bf16.xpose.msra.mxu0 0
    %950 = vmatprep.subr.bf16.mxu0 0
    %951 = vmatpush1.bf16.xpose.msra.mxu0 0
    %952 = vmatprep.subr.bf16.mxu0 0
    %953 = vmatpush1.bf16.xpose.msra.mxu0 0
    %954 = vmatprep.subr.bf16.mxu0 0
    %955 = vmatpush1.bf16.xpose.msra.mxu0 0
    %956 = vmatprep.subr.bf16.mxu0 0
    %957 = vmatpush1.bf16.xpose.msra.mxu0 0
    %958 = vmatprep.subr.bf16.mxu0 0
    %959 = vmatpush1.bf16.xpose.msra.mxu0 0
    %960 = vmatprep.subr.bf16.mxu0 0
    %961 = vmatpush1.bf16.xpose.msra.mxu0 0
    %962 = vmatprep.subr.bf16.mxu0 0
    %963 = vmatpush1.bf16.xpose.msra.mxu0 0
    %964 = vmatprep.subr.bf16.mxu0 0
    %965 = vmatpush1.bf16.xpose.msra.mxu0 0
    %966 = vmatprep.subr.bf16.mxu0 0
    %967 = vmatpush1.bf16.xpose.msra.mxu0 0
    %968 = vmatprep.subr.bf16.mxu0 0
    %969 = vmatpush1.bf16.xpose.msra.mxu0 0
    %970 = vmatprep.mubr.bf16.mxu0 0
    %971 = vmatmul.mubr.bf16.gmra.mrb[0].mxu0 %v933
    %v972 = vpop.f32.mrb[0].mxu0
    %v973 = vadd.f32 0.0, %v972
    %v974 = vpop.f32.mrb[0].mxu0
    %v975 = vpop.f32.mrb[0].mxu0
    %v976 = vpop.f32.mrb[0].mxu0
    %977 = vdwg.mxu0
    %v979 = vsel %vm471, %v346, 0
    %v982 = vsel %vm471, %v406, 0
    %984 = vmatprep.subr.bf16.mxu0 0
    %985 = vmatpush1.bf16.xpose.msra.mxu0 %v982
    %986 = vmatprep.subr.bf16.mxu0 0
    %987 = vmatpush1.bf16.xpose.msra.mxu0 0
    %988 = vmatprep.subr.bf16.mxu0 0
    %989 = vmatpush1.bf16.xpose.msra.mxu0 0
    %990 = vmatprep.subr.bf16.mxu0 0
    %991 = vmatpush1.bf16.xpose.msra.mxu0 0
    %992 = vmatprep.subr.bf16.mxu0 0
    %993 = vmatpush1.bf16.xpose.msra.mxu0 0
    %994 = vmatprep.subr.bf16.mxu0 0
    %995 = vmatpush1.bf16.xpose.msra.mxu0 0
    %996 = vmatprep.subr.bf16.mxu0 0
    %997 = vmatpush1.bf16.xpose.msra.mxu0 0
    %998 = vmatprep.subr.bf16.mxu0 0
    %999 = vmatpush1.bf16.xpose.msra.mxu0 0
    %1000 = vmatprep.subr.bf16.mxu0 0
    %1001 = vmatpush1.bf16.xpose.msra.mxu0 0
    %1002 = vmatprep.subr.bf16.mxu0 0
    %1003 = vmatpush1.bf16.xpose.msra.mxu0 0
    %1004 = vmatprep.subr.bf16.mxu0 0
    %1005 = vmatpush1.bf16.xpose.msra.mxu0 0
    %1006 = vmatprep.subr.bf16.mxu0 0
    %1007 = vmatpush1.bf16.xpose.msra.mxu0 0
    %1008 = vmatprep.subr.bf16.mxu0 0
    %1009 = vmatpush1.bf16.xpose.msra.mxu0 0
    %1010 = vmatprep.subr.bf16.mxu0 0
    %1011 = vmatpush1.bf16.xpose.msra.mxu0 0
    %1012 = vmatprep.subr.bf16.mxu0 0
    %1013 = vmatpush1.bf16.xpose.msra.mxu0 0
    %1014 = vmatprep.subr.bf16.mxu0 0
    %1015 = vmatpush1.bf16.xpose.msra.mxu0 0
    %1016 = vmatprep.mubr.bf16.mxu0 0
    %1017 = vmatmul.mubr.bf16.gmra.mrb[0].mxu0 %v979
    %v1018 = vpop.f32.mrb[0].mxu0
    %v1019 = vadd.f32 0.0, %v1018
    %v1020 = vpop.f32.mrb[0].mxu0
    %v1021 = vpop.f32.mrb[0].mxu0
    %v1022 = vpop.f32.mrb[0].mxu0
    %1023 = vdwg.mxu0
    %v1025 = vsel %vm471, %v347, 0
    %v1028 = vsel %vm471, %v407, 0
    %1030 = vmatprep.subr.bf16.mxu0 0
    %1031 = vmatpush1.bf16.xpose.msra.mxu0 %v1028
    %1032 = vmatprep.subr.bf16.mxu0 0
    %1033 = vmatpush1.bf16.xpose.msra.mxu0 0
    %1034 = vmatprep.subr.bf16.mxu0 0
    %1035 = vmatpush1.bf16.xpose.msra.mxu0 0
    %1036 = vmatprep.subr.bf16.mxu0 0
    %1037 = vmatpush1.bf16.xpose.msra.mxu0 0
    %1038 = vmatprep.subr.bf16.mxu0 0
    %1039 = vmatpush1.bf16.xpose.msra.mxu0 0
    %1040 = vmatprep.subr.bf16.mxu0 0
    %1041 = vmatpush1.bf16.xpose.msra.mxu0 0
    %1042 = vmatprep.subr.bf16.mxu0 0
    %1043 = vmatpush1.bf16.xpose.msra.mxu0 0
    %1044 = vmatprep.subr.bf16.mxu0 0
    %1045 = vmatpush1.bf16.xpose.msra.mxu0 0
    %1046 = vmatprep.subr.bf16.mxu0 0
    %1047 = vmatpush1.bf16.xpose.msra.mxu0 0
    %1048 = vmatprep.subr.bf16.mxu0 0
    %1049 = vmatpush1.bf16.xpose.msra.mxu0 0
    %1050 = vmatprep.subr.bf16.mxu0 0
    %1051 = vmatpush1.bf16.xpose.msra.mxu0 0
    %1052 = vmatprep.subr.bf16.mxu0 0
    %1053 = vmatpush1.bf16.xpose.msra.mxu0 0
    %1054 = vmatprep.subr.bf16.mxu0 0
    %1055 = vmatpush1.bf16.xpose.msra.mxu0 0
    %1056 = vmatprep.subr.bf16.mxu0 0
    %1057 = vmatpush1.bf16.xpose.msra.mxu0 0
    %1058 = vmatprep.subr.bf16.mxu0 0
    %1059 = vmatpush1.bf16.xpose.msra.mxu0 0
    %1060 = vmatprep.subr.bf16.mxu0 0
    %1061 = vmatpush1.bf16.xpose.msra.mxu0 0
    %1062 = vmatprep.mubr.bf16.mxu0 0
    %1063 = vmatmul.mubr.bf16.gmra.mrb[0].mxu0 %v1025
    %v1064 = vpop.f32.mrb[0].mxu0
    %v1065 = vadd.f32 0.0, %v1064
    %v1066 = vpop.f32.mrb[0].mxu0
    %v1067 = vpop.f32.mrb[0].mxu0
    %v1068 = vpop.f32.mrb[0].mxu0
    %1069 = vdwg.mxu0
    %v1071 = vsel %vm471, %v348, 0
    %v1074 = vsel %vm471, %v408, 0
    %1076 = vmatprep.subr.bf16.mxu0 0
    %1077 = vmatpush1.bf16.xpose.msra.mxu0 %v1074
    %1078 = vmatprep.subr.bf16.mxu0 0
    %1079 = vmatpush1.bf16.xpose.msra.mxu0 0
    %1080 = vmatprep.subr.bf16.mxu0 0
    %1081 = vmatpush1.bf16.xpose.msra.mxu0 0
    %1082 = vmatprep.subr.bf16.mxu0 0
    %1083 = vmatpush1.bf16.xpose.msra.mxu0 0
    %1084 = vmatprep.subr.bf16.mxu0 0
    %1085 = vmatpush1.bf16.xpose.msra.mxu0 0
    %1086 = vmatprep.subr.bf16.mxu0 0
    %1087 = vmatpush1.bf16.xpose.msra.mxu0 0
    %1088 = vmatprep.subr.bf16.mxu0 0
    %1089 = vmatpush1.bf16.xpose.msra.mxu0 0
    %1090 = vmatprep.subr.bf16.mxu0 0
    %1091 = vmatpush1.bf16.xpose.msra.mxu0 0
    %1092 = vmatprep.subr.bf16.mxu0 0
    %1093 = vmatpush1.bf16.xpose.msra.mxu0 0
    %1094 = vmatprep.subr.bf16.mxu0 0
    %1095 = vmatpush1.bf16.xpose.msra.mxu0 0
    %1096 = vmatprep.subr.bf16.mxu0 0
    %1097 = vmatpush1.bf16.xpose.msra.mxu0 0
    %1098 = vmatprep.subr.bf16.mxu0 0
    %1099 = vmatpush1.bf16.xpose.msra.mxu0 0
    %1100 = vmatprep.subr.bf16.mxu0 0
    %1101 = vmatpush1.bf16.xpose.msra.mxu0 0
    %1102 = vmatprep.subr.bf16.mxu0 0
    %1103 = vmatpush1.bf16.xpose.msra.mxu0 0
    %1104 = vmatprep.subr.bf16.mxu0 0
    %1105 = vmatpush1.bf16.xpose.msra.mxu0 0
    %1106 = vmatprep.subr.bf16.mxu0 0
    %1107 = vmatpush1.bf16.xpose.msra.mxu0 0
    %1108 = vmatprep.mubr.bf16.mxu0 0
    %1109 = vmatmul.mubr.bf16.gmra.mrb[0].mxu0 %v1071
    %v1110 = vpop.f32.mrb[0].mxu0
    %v1111 = vadd.f32 0.0, %v1110
    %v1112 = vpop.f32.mrb[0].mxu0
    %v1113 = vpop.f32.mrb[0].mxu0
    %v1114 = vpop.f32.mrb[0].mxu0
    %1115 = vdwg.mxu0
    %v1117 = vsel %vm471, %v349, 0
    %v1120 = vsel %vm471, %v409, 0
    %1122 = vmatprep.subr.bf16.mxu0 0
    %1123 = vmatpush1.bf16.xpose.msra.mxu0 %v1120
    %1124 = vmatprep.subr.bf16.mxu0 0
    %1125 = vmatpush1.bf16.xpose.msra.mxu0 0
    %1126 = vmatprep.subr.bf16.mxu0 0
    %1127 = vmatpush1.bf16.xpose.msra.mxu0 0
    %1128 = vmatprep.subr.bf16.mxu0 0
    %1129 = vmatpush1.bf16.xpose.msra.mxu0 0
    %1130 = vmatprep.subr.bf16.mxu0 0
    %1131 = vmatpush1.bf16.xpose.msra.mxu0 0
    %1132 = vmatprep.subr.bf16.mxu0 0
    %1133 = vmatpush1.bf16.xpose.msra.mxu0 0
    %1134 = vmatprep.subr.bf16.mxu0 0
    %1135 = vmatpush1.bf16.xpose.msra.mxu0 0
    %1136 = vmatprep.subr.bf16.mxu0 0
    %1137 = vmatpush1.bf16.xpose.msra.mxu0 0
    %1138 = vmatprep.subr.bf16.mxu0 0
    %1139 = vmatpush1.bf16.xpose.msra.mxu0 0
    %1140 = vmatprep.subr.bf16.mxu0 0
    %1141 = vmatpush1.bf16.xpose.msra.mxu0 0
    %1142 = vmatprep.subr.bf16.mxu0 0
    %1143 = vmatpush1.bf16.xpose.msra.mxu0 0
    %1144 = vmatprep.subr.bf16.mxu0 0
    %1145 = vmatpush1.bf16.xpose.msra.mxu0 0
    %1146 = vmatprep.subr.bf16.mxu0 0
    %1147 = vmatpush1.bf16.xpose.msra.mxu0 0
    %1148 = vmatprep.subr.bf16.mxu0 0
    %1149 = vmatpush1.bf16.xpose.msra.mxu0 0
    %1150 = vmatprep.subr.bf16.mxu0 0
    %1151 = vmatpush1.bf16.xpose.msra.mxu0 0
    %1152 = vmatprep.subr.bf16.mxu0 0
    %1153 = vmatpush1.bf16.xpose.msra.mxu0 0
    %1154 = vmatprep.mubr.bf16.mxu0 0
    %1155 = vmatmul.mubr.bf16.gmra.mrb[0].mxu0 %v1117
    %v1156 = vpop.f32.mrb[0].mxu0
    %v1157 = vadd.f32 0.0, %v1156
    %v1158 = vpop.f32.mrb[0].mxu0
    %v1159 = vpop.f32.mrb[0].mxu0
    %v1160 = vpop.f32.mrb[0].mxu0
    %1161 = vdwg.mxu0
    %v1163 = vsel %vm471, %v350, 0
    %v1166 = vsel %vm471, %v410, 0
    %1168 = vmatprep.subr.bf16.mxu0 0
    %1169 = vmatpush1.bf16.xpose.msra.mxu0 %v1166
    %1170 = vmatprep.subr.bf16.mxu0 0
    %1171 = vmatpush1.bf16.xpose.msra.mxu0 0
    %1172 = vmatprep.subr.bf16.mxu0 0
    %1173 = vmatpush1.bf16.xpose.msra.mxu0 0
    %1174 = vmatprep.subr.bf16.mxu0 0
    %1175 = vmatpush1.bf16.xpose.msra.mxu0 0
    %1176 = vmatprep.subr.bf16.mxu0 0
    %1177 = vmatpush1.bf16.xpose.msra.mxu0 0
    %1178 = vmatprep.subr.bf16.mxu0 0
    %1179 = vmatpush1.bf16.xpose.msra.mxu0 0
    %1180 = vmatprep.subr.bf16.mxu0 0
    %1181 = vmatpush1.bf16.xpose.msra.mxu0 0
    %1182 = vmatprep.subr.bf16.mxu0 0
    %1183 = vmatpush1.bf16.xpose.msra.mxu0 0
    %1184 = vmatprep.subr.bf16.mxu0 0
    %1185 = vmatpush1.bf16.xpose.msra.mxu0 0
    %1186 = vmatprep.subr.bf16.mxu0 0
    %1187 = vmatpush1.bf16.xpose.msra.mxu0 0
    %1188 = vmatprep.subr.bf16.mxu0 0
    %1189 = vmatpush1.bf16.xpose.msra.mxu0 0
    %1190 = vmatprep.subr.bf16.mxu0 0
    %1191 = vmatpush1.bf16.xpose.msra.mxu0 0
    %1192 = vmatprep.subr.bf16.mxu0 0
    %1193 = vmatpush1.bf16.xpose.msra.mxu0 0
    %1194 = vmatprep.subr.bf16.mxu0 0
    %1195 = vmatpush1.bf16.xpose.msra.mxu0 0
    %1196 = vmatprep.subr.bf16.mxu0 0
    %1197 = vmatpush1.bf16.xpose.msra.mxu0 0
    %1198 = vmatprep.subr.bf16.mxu0 0
    %1199 = vmatpush1.bf16.xpose.msra.mxu0 0
    %1200 = vmatprep.mubr.bf16.mxu0 0
    %1201 = vmatmul.mubr.bf16.gmra.mrb[0].mxu0 %v1163
    %v1202 = vpop.f32.mrb[0].mxu0
    %v1203 = vadd.f32 0.0, %v1202
    %v1204 = vpop.f32.mrb[0].mxu0
    %v1205 = vpop.f32.mrb[0].mxu0
    %v1206 = vpop.f32.mrb[0].mxu0
    %1207 = vdwg.mxu0
    %vm1208 = vcmask 64512
    %v1209 = vsel %vm1208, %v513, -inf
    %1210 = vmax.xlane.f32.xlu0 %v1209
    %v1211 = vpop.xlane.xlu0 %1210
    %v1212 = vsel %vm1208, %v559, -inf
    %1213 = vmax.xlane.f32.xlu0 %v1212
    %v1214 = vpop.xlane.xlu0 %1213
    %v1215 = vsel %vm1208, %v605, -inf
    %1216 = vmax.xlane.f32.xlu0 %v1215
    %v1217 = vpop.xlane.xlu0 %1216
    %v1218 = vsel %vm1208, %v651, -inf
    %1219 = vmax.xlane.f32.xlu0 %v1218
    %v1220 = vpop.xlane.xlu0 %1219
    %v1221 = vsel %vm1208, %v697, -inf
    %1222 = vmax.xlane.f32.xlu0 %v1221
    %v1223 = vpop.xlane.xlu0 %1222
    %v1224 = vsel %vm1208, %v743, -inf
    %1225 = vmax.xlane.f32.xlu0 %v1224
    %v1226 = vpop.xlane.xlu0 %1225
    %v1227 = vsel %vm1208, %v789, -inf
    %1228 = vmax.xlane.f32.xlu0 %v1227
    %v1229 = vpop.xlane.xlu0 %1228
    %v1230 = vsel %vm1208, %v835, -inf
    %1231 = vmax.xlane.f32.xlu0 %v1230
    %v1232 = vpop.xlane.xlu0 %1231
    %v1233 = vsel %vm1208, %v881, -inf
    %1234 = vmax.xlane.f32.xlu0 %v1233
    %v1235 = vpop.xlane.xlu0 %1234
    %v1236 = vsel %vm1208, %v927, -inf
    %1237 = vmax.xlane.f32.xlu0 %v1236
    %v1238 = vpop.xlane.xlu0 %1237
    %v1239 = vsel %vm1208, %v973, -inf
    %1240 = vmax.xlane.f32.xlu0 %v1239
    %v1241 = vpop.xlane.xlu0 %1240
    %v1242 = vsel %vm1208, %v1019, -inf
    %1243 = vmax.xlane.f32.xlu0 %v1242
    %v1244 = vpop.xlane.xlu0 %1243
    %v1245 = vsel %vm1208, %v1065, -inf
    %1246 = vmax.xlane.f32.xlu0 %v1245
    %v1247 = vpop.xlane.xlu0 %1246
    %v1248 = vsel %vm1208, %v1111, -inf
    %1249 = vmax.xlane.f32.xlu0 %v1248
    %v1250 = vpop.xlane.xlu0 %1249
    %v1251 = vsel %vm1208, %v1157, -inf
    %1252 = vmax.xlane.f32.xlu0 %v1251
    %v1253 = vpop.xlane.xlu0 %1252
    %v1254 = vsel %vm1208, %v1203, -inf
    %1255 = vmax.xlane.f32.xlu0 %v1254
    %v1256 = vpop.xlane.xlu0 %1255
    %v1257 = vsub.f32 %v513, %v1211
    %v1258 = vsub.f32 %v559, %v1214
    %v1259 = vsub.f32 %v605, %v1217
    %v1260 = vsub.f32 %v651, %v1220
    %v1261 = vsub.f32 %v697, %v1223
    %v1262 = vsub.f32 %v743, %v1226
    %v1263 = vsub.f32 %v789, %v1229
    %v1264 = vsub.f32 %v835, %v1232
    %v1265 = vsub.f32 %v881, %v1235
    %v1266 = vsub.f32 %v927, %v1238
    %v1267 = vsub.f32 %v973, %v1241
    %v1268 = vsub.f32 %v1019, %v1244
    %v1269 = vsub.f32 %v1065, %v1247
    %v1270 = vsub.f32 %v1111, %v1250
    %v1271 = vsub.f32 %v1157, %v1253
    %v1272 = vsub.f32 %v1203, %v1256
    %v1273 = vmul.f32 %v1257, 1.442695
    %v1274 = vpow.pop %v1273
    %v1275 = vmul.f32 %v1258, 1.442695
    %v1276 = vpow.pop %v1275
    %v1277 = vmul.f32 %v1259, 1.442695
    %v1278 = vpow.pop %v1277
    %v1279 = vmul.f32 %v1260, 1.442695
    %v1280 = vpow.pop %v1279
    %v1281 = vmul.f32 %v1261, 1.442695
    %v1282 = vpow.pop %v1281
    %v1283 = vmul.f32 %v1262, 1.442695
    %v1284 = vpow.pop %v1283
    %v1285 = vmul.f32 %v1263, 1.442695
    %v1286 = vpow.pop %v1285
    %v1287 = vmul.f32 %v1264, 1.442695
    %v1288 = vpow.pop %v1287
    %v1289 = vmul.f32 %v1265, 1.442695
    %v1290 = vpow.pop %v1289
    %v1291 = vmul.f32 %v1266, 1.442695
    %v1292 = vpow.pop %v1291
    %v1293 = vmul.f32 %v1267, 1.442695
    %v1294 = vpow.pop %v1293
    %v1295 = vmul.f32 %v1268, 1.442695
    %v1296 = vpow.pop %v1295
    %v1297 = vmul.f32 %v1269, 1.442695
    %v1298 = vpow.pop %v1297
    %v1299 = vmul.f32 %v1270, 1.442695
    %v1300 = vpow.pop %v1299
    %v1301 = vmul.f32 %v1271, 1.442695
    %v1302 = vpow.pop %v1301
    %v1303 = vmul.f32 %v1272, 1.442695
    %v1304 = vpow.pop %v1303
    %v1305 = vsel %vm1208, %v1274, 0.0
    %1306 = vadd.xlane.f32.xlu0 %v1305
    %v1307 = vpop.xlane.xlu0 %1306
    %v1308 = vsel %vm1208, %v1276, 0.0
    %1309 = vadd.xlane.f32.xlu0 %v1308
    %v1310 = vpop.xlane.xlu0 %1309
    %v1311 = vsel %vm1208, %v1278, 0.0
    %1312 = vadd.xlane.f32.xlu0 %v1311
    %v1313 = vpop.xlane.xlu0 %1312
    %v1314 = vsel %vm1208, %v1280, 0.0
    %1315 = vadd.xlane.f32.xlu0 %v1314
    %v1316 = vpop.xlane.xlu0 %1315
    %v1317 = vsel %vm1208, %v1282, 0.0
    %1318 = vadd.xlane.f32.xlu0 %v1317
    %v1319 = vpop.xlane.xlu0 %1318
    %v1320 = vsel %vm1208, %v1284, 0.0
    %1321 = vadd.xlane.f32.xlu0 %v1320
    %v1322 = vpop.xlane.xlu0 %1321
    %v1323 = vsel %vm1208, %v1286, 0.0
    %1324 = vadd.xlane.f32.xlu0 %v1323
    %v1325 = vpop.xlane.xlu0 %1324
    %v1326 = vsel %vm1208, %v1288, 0.0
    %1327 = vadd.xlane.f32.xlu0 %v1326
    %v1328 = vpop.xlane.xlu0 %1327
    %v1329 = vsel %vm1208, %v1290, 0.0
    %1330 = vadd.xlane.f32.xlu0 %v1329
    %v1331 = vpop.xlane.xlu0 %1330
    %v1332 = vsel %vm1208, %v1292, 0.0
    %1333 = vadd.xlane.f32.xlu0 %v1332
    %v1334 = vpop.xlane.xlu0 %1333
    %v1335 = vsel %vm1208, %v1294, 0.0
    %1336 = vadd.xlane.f32.xlu0 %v1335
    %v1337 = vpop.xlane.xlu0 %1336
    %v1338 = vsel %vm1208, %v1296, 0.0
    %1339 = vadd.xlane.f32.xlu0 %v1338
    %v1340 = vpop.xlane.xlu0 %1339
    %v1341 = vsel %vm1208, %v1298, 0.0
    %1342 = vadd.xlane.f32.xlu0 %v1341
    %v1343 = vpop.xlane.xlu0 %1342
    %v1344 = vsel %vm1208, %v1300, 0.0
    %1345 = vadd.xlane.f32.xlu0 %v1344
    %v1346 = vpop.xlane.xlu0 %1345
    %v1347 = vsel %vm1208, %v1302, 0.0
    %1348 = vadd.xlane.f32.xlu0 %v1347
    %v1349 = vpop.xlane.xlu0 %1348
    %v1350 = vsel %vm1208, %v1304, 0.0
    %1351 = vadd.xlane.f32.xlu0 %v1350
    %v1352 = vpop.xlane.xlu0 %1351
    %v1353 = vrcp.pop %v1307
    %v1354 = vrcp.pop %v1310
    %v1355 = vrcp.pop %v1313
    %v1356 = vrcp.pop %v1316
    %v1357 = vrcp.pop %v1319
    %v1358 = vrcp.pop %v1322
    %v1359 = vrcp.pop %v1325
    %v1360 = vrcp.pop %v1328
    %v1361 = vrcp.pop %v1331
    %v1362 = vrcp.pop %v1334
    %v1363 = vrcp.pop %v1337
    %v1364 = vrcp.pop %v1340
    %v1365 = vrcp.pop %v1343
    %v1366 = vrcp.pop %v1346
    %v1367 = vrcp.pop %v1349
    %v1368 = vrcp.pop %v1352
    %v1369 = vmul.f32 %v1274, %v1353
    %v1370 = vmul.f32 %v1276, %v1354
    %v1371 = vmul.f32 %v1278, %v1355
    %v1372 = vmul.f32 %v1280, %v1356
    %v1373 = vmul.f32 %v1282, %v1357
    %v1374 = vmul.f32 %v1284, %v1358
    %v1375 = vmul.f32 %v1286, %v1359
    %v1376 = vmul.f32 %v1288, %v1360
    %v1377 = vmul.f32 %v1290, %v1361
    %v1378 = vmul.f32 %v1292, %v1362
    %v1379 = vmul.f32 %v1294, %v1363
    %v1380 = vmul.f32 %v1296, %v1364
    %v1381 = vmul.f32 %v1298, %v1365
    %v1382 = vmul.f32 %v1300, %v1366
    %v1383 = vmul.f32 %v1302, %v1367
    %v1384 = vmul.f32 %v1304, %v1368
    %v1385 = vpack.c.bf16 %v1369, %v1369
    %v1386 = vpack.c.bf16 %v1370, %v1370
    %v1387 = vpack.c.bf16 %v1371, %v1371
    %v1388 = vpack.c.bf16 %v1372, %v1372
    %v1389 = vpack.c.bf16 %v1373, %v1373
    %v1390 = vpack.c.bf16 %v1374, %v1374
    %v1391 = vpack.c.bf16 %v1375, %v1375
    %v1392 = vpack.c.bf16 %v1376, %v1376
    %v1393 = vpack.c.bf16 %v1377, %v1377
    %v1394 = vpack.c.bf16 %v1378, %v1378
    %v1395 = vpack.c.bf16 %v1379, %v1379
    %v1396 = vpack.c.bf16 %v1380, %v1380
    %v1397 = vpack.c.bf16 %v1381, %v1381
    %v1398 = vpack.c.bf16 %v1382, %v1382
    %v1399 = vpack.c.bf16 %v1383, %v1383
    %v1400 = vpack.c.bf16 %v1384, %v1384
    %v1402 = vsel %vm1208, %v1385, 0
    %vm1404 = vcmask 1043456
    %v1406 = vsel %vm1404, %v455, 0
    %1408 = vmatprep.subr.bf16.mxu0 0
    %1409 = vmatpush1.bf16.msra.mxu0 %v1406
    %1410 = vmatprep.subr.bf16.mxu0 0
    %1411 = vmatpush1.bf16.msra.mxu0 0
    %1412 = vmatprep.subr.bf16.mxu0 0
    %1413 = vmatpush1.bf16.msra.mxu0 0
    %1414 = vmatprep.subr.bf16.mxu0 0
    %1415 = vmatpush1.bf16.msra.mxu0 0
    %1416 = vmatprep.subr.bf16.mxu0 0
    %1417 = vmatpush1.bf16.msra.mxu0 0
    %1418 = vmatprep.subr.bf16.mxu0 0
    %1419 = vmatpush1.bf16.msra.mxu0 0
    %1420 = vmatprep.subr.bf16.mxu0 0
    %1421 = vmatpush1.bf16.msra.mxu0 0
    %1422 = vmatprep.subr.bf16.mxu0 0
    %1423 = vmatpush1.bf16.msra.mxu0 0
    %1424 = vmatprep.subr.bf16.mxu0 0
    %1425 = vmatpush1.bf16.msra.mxu0 0
    %1426 = vmatprep.subr.bf16.mxu0 0
    %1427 = vmatpush1.bf16.msra.mxu0 0
    %1428 = vmatprep.subr.bf16.mxu0 0
    %1429 = vmatpush1.bf16.msra.mxu0 0
    %1430 = vmatprep.subr.bf16.mxu0 0
    %1431 = vmatpush1.bf16.msra.mxu0 0
    %1432 = vmatprep.subr.bf16.mxu0 0
    %1433 = vmatpush1.bf16.msra.mxu0 0
    %1434 = vmatprep.subr.bf16.mxu0 0
    %1435 = vmatpush1.bf16.msra.mxu0 0
    %1436 = vmatprep.subr.bf16.mxu0 0
    %1437 = vmatpush1.bf16.msra.mxu0 0
    %1438 = vmatprep.subr.bf16.mxu0 0
    %1439 = vmatpush1.bf16.msra.mxu0 0
    %1440 = vmatprep.mubr.bf16.mxu0 0
    %1441 = vmatmul.mubr.bf16.gmra.mrb[0].mxu0 %v1402
    %v1442 = vpop.f32.mrb[0].mxu0
    %v1443 = vadd.f32 0.0, %v1442
    %v1444 = vpop.f32.mrb[0].mxu0
    %v1445 = vpop.f32.mrb[0].mxu0
    %v1446 = vpop.f32.mrb[0].mxu0
    %1447 = vdwg.mxu0
    %v1449 = vsel %vm1208, %v1386, 0
    %v1452 = vsel %vm1404, %v456, 0
    %1454 = vmatprep.subr.bf16.mxu0 0
    %1455 = vmatpush1.bf16.msra.mxu0 %v1452
    %1456 = vmatprep.subr.bf16.mxu0 0
    %1457 = vmatpush1.bf16.msra.mxu0 0
    %1458 = vmatprep.subr.bf16.mxu0 0
    %1459 = vmatpush1.bf16.msra.mxu0 0
    %1460 = vmatprep.subr.bf16.mxu0 0
    %1461 = vmatpush1.bf16.msra.mxu0 0
    %1462 = vmatprep.subr.bf16.mxu0 0
    %1463 = vmatpush1.bf16.msra.mxu0 0
    %1464 = vmatprep.subr.bf16.mxu0 0
    %1465 = vmatpush1.bf16.msra.mxu0 0
    %1466 = vmatprep.subr.bf16.mxu0 0
    %1467 = vmatpush1.bf16.msra.mxu0 0
    %1468 = vmatprep.subr.bf16.mxu0 0
    %1469 = vmatpush1.bf16.msra.mxu0 0
    %1470 = vmatprep.subr.bf16.mxu0 0
    %1471 = vmatpush1.bf16.msra.mxu0 0
    %1472 = vmatprep.subr.bf16.mxu0 0
    %1473 = vmatpush1.bf16.msra.mxu0 0
    %1474 = vmatprep.subr.bf16.mxu0 0
    %1475 = vmatpush1.bf16.msra.mxu0 0
    %1476 = vmatprep.subr.bf16.mxu0 0
    %1477 = vmatpush1.bf16.msra.mxu0 0
    %1478 = vmatprep.subr.bf16.mxu0 0
    %1479 = vmatpush1.bf16.msra.mxu0 0
    %1480 = vmatprep.subr.bf16.mxu0 0
    %1481 = vmatpush1.bf16.msra.mxu0 0
    %1482 = vmatprep.subr.bf16.mxu0 0
    %1483 = vmatpush1.bf16.msra.mxu0 0
    %1484 = vmatprep.subr.bf16.mxu0 0
    %1485 = vmatpush1.bf16.msra.mxu0 0
    %1486 = vmatprep.mubr.bf16.mxu0 0
    %1487 = vmatmul.mubr.bf16.gmra.mrb[0].mxu0 %v1449
    %v1488 = vpop.f32.mrb[0].mxu0
    %v1489 = vadd.f32 0.0, %v1488
    %v1490 = vpop.f32.mrb[0].mxu0
    %v1491 = vpop.f32.mrb[0].mxu0
    %v1492 = vpop.f32.mrb[0].mxu0
    %1493 = vdwg.mxu0
    %v1495 = vsel %vm1208, %v1387, 0
    %v1498 = vsel %vm1404, %v457, 0
    %1500 = vmatprep.subr.bf16.mxu0 0
    %1501 = vmatpush1.bf16.msra.mxu0 %v1498
    %1502 = vmatprep.subr.bf16.mxu0 0
    %1503 = vmatpush1.bf16.msra.mxu0 0
    %1504 = vmatprep.subr.bf16.mxu0 0
    %1505 = vmatpush1.bf16.msra.mxu0 0
    %1506 = vmatprep.subr.bf16.mxu0 0
    %1507 = vmatpush1.bf16.msra.mxu0 0
    %1508 = vmatprep.subr.bf16.mxu0 0
    %1509 = vmatpush1.bf16.msra.mxu0 0
    %1510 = vmatprep.subr.bf16.mxu0 0
    %1511 = vmatpush1.bf16.msra.mxu0 0
    %1512 = vmatprep.subr.bf16.mxu0 0
    %1513 = vmatpush1.bf16.msra.mxu0 0
    %1514 = vmatprep.subr.bf16.mxu0 0
    %1515 = vmatpush1.bf16.msra.mxu0 0
    %1516 = vmatprep.subr.bf16.mxu0 0
    %1517 = vmatpush1.bf16.msra.mxu0 0
    %1518 = vmatprep.subr.bf16.mxu0 0
    %1519 = vmatpush1.bf16.msra.mxu0 0
    %1520 = vmatprep.subr.bf16.mxu0 0
    %1521 = vmatpush1.bf16.msra.mxu0 0
    %1522 = vmatprep.subr.bf16.mxu0 0
    %1523 = vmatpush1.bf16.msra.mxu0 0
    %1524 = vmatprep.subr.bf16.mxu0 0
    %1525 = vmatpush1.bf16.msra.mxu0 0
    %1526 = vmatprep.subr.bf16.mxu0 0
    %1527 = vmatpush1.bf16.msra.mxu0 0
    %1528 = vmatprep.subr.bf16.mxu0 0
    %1529 = vmatpush1.bf16.msra.mxu0 0
    %1530 = vmatprep.subr.bf16.mxu0 0
    %1531 = vmatpush1.bf16.msra.mxu0 0
    %1532 = vmatprep.mubr.bf16.mxu0 0
    %1533 = vmatmul.mubr.bf16.gmra.mrb[0].mxu0 %v1495
    %v1534 = vpop.f32.mrb[0].mxu0
    %v1535 = vadd.f32 0.0, %v1534
    %v1536 = vpop.f32.mrb[0].mxu0
    %v1537 = vpop.f32.mrb[0].mxu0
    %v1538 = vpop.f32.mrb[0].mxu0
    %1539 = vdwg.mxu0
    %v1541 = vsel %vm1208, %v1388, 0
    %v1544 = vsel %vm1404, %v458, 0
    %1546 = vmatprep.subr.bf16.mxu0 0
    %1547 = vmatpush1.bf16.msra.mxu0 %v1544
    %1548 = vmatprep.subr.bf16.mxu0 0
    %1549 = vmatpush1.bf16.msra.mxu0 0
    %1550 = vmatprep.subr.bf16.mxu0 0
    %1551 = vmatpush1.bf16.msra.mxu0 0
    %1552 = vmatprep.subr.bf16.mxu0 0
    %1553 = vmatpush1.bf16.msra.mxu0 0
    %1554 = vmatprep.subr.bf16.mxu0 0
    %1555 = vmatpush1.bf16.msra.mxu0 0
    %1556 = vmatprep.subr.bf16.mxu0 0
    %1557 = vmatpush1.bf16.msra.mxu0 0
    %1558 = vmatprep.subr.bf16.mxu0 0
    %1559 = vmatpush1.bf16.msra.mxu0 0
    %1560 = vmatprep.subr.bf16.mxu0 0
    %1561 = vmatpush1.bf16.msra.mxu0 0
    %1562 = vmatprep.subr.bf16.mxu0 0
    %1563 = vmatpush1.bf16.msra.mxu0 0
    %1564 = vmatprep.subr.bf16.mxu0 0
    %1565 = vmatpush1.bf16.msra.mxu0 0
    %1566 = vmatprep.subr.bf16.mxu0 0
    %1567 = vmatpush1.bf16.msra.mxu0 0
    %1568 = vmatprep.subr.bf16.mxu0 0
    %1569 = vmatpush1.bf16.msra.mxu0 0
    %1570 = vmatprep.subr.bf16.mxu0 0
    %1571 = vmatpush1.bf16.msra.mxu0 0
    %1572 = vmatprep.subr.bf16.mxu0 0
    %1573 = vmatpush1.bf16.msra.mxu0 0
    %1574 = vmatprep.subr.bf16.mxu0 0
    %1575 = vmatpush1.bf16.msra.mxu0 0
    %1576 = vmatprep.subr.bf16.mxu0 0
    %1577 = vmatpush1.bf16.msra.mxu0 0
    %1578 = vmatprep.mubr.bf16.mxu0 0
    %1579 = vmatmul.mubr.bf16.gmra.mrb[0].mxu0 %v1541
    %v1580 = vpop.f32.mrb[0].mxu0
    %v1581 = vadd.f32 0.0, %v1580
    %v1582 = vpop.f32.mrb[0].mxu0
    %v1583 = vpop.f32.mrb[0].mxu0
    %v1584 = vpop.f32.mrb[0].mxu0
    %1585 = vdwg.mxu0
    %v1587 = vsel %vm1208, %v1389, 0
    %v1590 = vsel %vm1404, %v459, 0
    %1592 = vmatprep.subr.bf16.mxu0 0
    %1593 = vmatpush1.bf16.msra.mxu0 %v1590
    %1594 = vmatprep.subr.bf16.mxu0 0
    %1595 = vmatpush1.bf16.msra.mxu0 0
    %1596 = vmatprep.subr.bf16.mxu0 0
    %1597 = vmatpush1.bf16.msra.mxu0 0
    %1598 = vmatprep.subr.bf16.mxu0 0
    %1599 = vmatpush1.bf16.msra.mxu0 0
    %1600 = vmatprep.subr.bf16.mxu0 0
    %1601 = vmatpush1.bf16.msra.mxu0 0
    %1602 = vmatprep.subr.bf16.mxu0 0
    %1603 = vmatpush1.bf16.msra.mxu0 0
    %1604 = vmatprep.subr.bf16.mxu0 0
    %1605 = vmatpush1.bf16.msra.mxu0 0
    %1606 = vmatprep.subr.bf16.mxu0 0
    %1607 = vmatpush1.bf16.msra.mxu0 0
    %1608 = vmatprep.subr.bf16.mxu0 0
    %1609 = vmatpush1.bf16.msra.mxu0 0
    %1610 = vmatprep.subr.bf16.mxu0 0
    %1611 = vmatpush1.bf16.msra.mxu0 0
    %1612 = vmatprep.subr.bf16.mxu0 0
    %1613 = vmatpush1.bf16.msra.mxu0 0
    %1614 = vmatprep.subr.bf16.mxu0 0
    %1615 = vmatpush1.bf16.msra.mxu0 0
    %1616 = vmatprep.subr.bf16.mxu0 0
    %1617 = vmatpush1.bf16.msra.mxu0 0
    %1618 = vmatprep.subr.bf16.mxu0 0
    %1619 = vmatpush1.bf16.msra.mxu0 0
    %1620 = vmatprep.subr.bf16.mxu0 0
    %1621 = vmatpush1.bf16.msra.mxu0 0
    %1622 = vmatprep.subr.bf16.mxu0 0
    %1623 = vmatpush1.bf16.msra.mxu0 0
    %1624 = vmatprep.mubr.bf16.mxu0 0
    %1625 = vmatmul.mubr.bf16.gmra.mrb[0].mxu0 %v1587
    %v1626 = vpop.f32.mrb[0].mxu0
    %v1627 = vadd.f32 0.0, %v1626
    %v1628 = vpop.f32.mrb[0].mxu0
    %v1629 = vpop.f32.mrb[0].mxu0
    %v1630 = vpop.f32.mrb[0].mxu0
    %1631 = vdwg.mxu0
    %v1633 = vsel %vm1208, %v1390, 0
    %v1636 = vsel %vm1404, %v460, 0
    %1638 = vmatprep.subr.bf16.mxu0 0
    %1639 = vmatpush1.bf16.msra.mxu0 %v1636
    %1640 = vmatprep.subr.bf16.mxu0 0
    %1641 = vmatpush1.bf16.msra.mxu0 0
    %1642 = vmatprep.subr.bf16.mxu0 0
    %1643 = vmatpush1.bf16.msra.mxu0 0
    %1644 = vmatprep.subr.bf16.mxu0 0
    %1645 = vmatpush1.bf16.msra.mxu0 0
    %1646 = vmatprep.subr.bf16.mxu0 0
    %1647 = vmatpush1.bf16.msra.mxu0 0
    %1648 = vmatprep.subr.bf16.mxu0 0
    %1649 = vmatpush1.bf16.msra.mxu0 0
    %1650 = vmatprep.subr.bf16.mxu0 0
    %1651 = vmatpush1.bf16.msra.mxu0 0
    %1652 = vmatprep.subr.bf16.mxu0 0
    %1653 = vmatpush1.bf16.msra.mxu0 0
    %1654 = vmatprep.subr.bf16.mxu0 0
    %1655 = vmatpush1.bf16.msra.mxu0 0
    %1656 = vmatprep.subr.bf16.mxu0 0
    %1657 = vmatpush1.bf16.msra.mxu0 0
    %1658 = vmatprep.subr.bf16.mxu0 0
    %1659 = vmatpush1.bf16.msra.mxu0 0
    %1660 = vmatprep.subr.bf16.mxu0 0
    %1661 = vmatpush1.bf16.msra.mxu0 0
    %1662 = vmatprep.subr.bf16.mxu0 0
    %1663 = vmatpush1.bf16.msra.mxu0 0
    %1664 = vmatprep.subr.bf16.mxu0 0
    %1665 = vmatpush1.bf16.msra.mxu0 0
    %1666 = vmatprep.subr.bf16.mxu0 0
    %1667 = vmatpush1.bf16.msra.mxu0 0
    %1668 = vmatprep.subr.bf16.mxu0 0
    %1669 = vmatpush1.bf16.msra.mxu0 0
    %1670 = vmatprep.mubr.bf16.mxu0 0
    %1671 = vmatmul.mubr.bf16.gmra.mrb[0].mxu0 %v1633
    %v1672 = vpop.f32.mrb[0].mxu0
    %v1673 = vadd.f32 0.0, %v1672
    %v1674 = vpop.f32.mrb[0].mxu0
    %v1675 = vpop.f32.mrb[0].mxu0
    %v1676 = vpop.f32.mrb[0].mxu0
    %1677 = vdwg.mxu0
    %v1679 = vsel %vm1208, %v1391, 0
    %v1682 = vsel %vm1404, %v461, 0
    %1684 = vmatprep.subr.bf16.mxu0 0
    %1685 = vmatpush1.bf16.msra.mxu0 %v1682
    %1686 = vmatprep.subr.bf16.mxu0 0
    %1687 = vmatpush1.bf16.msra.mxu0 0
    %1688 = vmatprep.subr.bf16.mxu0 0
    %1689 = vmatpush1.bf16.msra.mxu0 0
    %1690 = vmatprep.subr.bf16.mxu0 0
    %1691 = vmatpush1.bf16.msra.mxu0 0
    %1692 = vmatprep.subr.bf16.mxu0 0
    %1693 = vmatpush1.bf16.msra.mxu0 0
    %1694 = vmatprep.subr.bf16.mxu0 0
    %1695 = vmatpush1.bf16.msra.mxu0 0
    %1696 = vmatprep.subr.bf16.mxu0 0
    %1697 = vmatpush1.bf16.msra.mxu0 0
    %1698 = vmatprep.subr.bf16.mxu0 0
    %1699 = vmatpush1.bf16.msra.mxu0 0
    %1700 = vmatprep.subr.bf16.mxu0 0
    %1701 = vmatpush1.bf16.msra.mxu0 0
    %1702 = vmatprep.subr.bf16.mxu0 0
    %1703 = vmatpush1.bf16.msra.mxu0 0
    %1704 = vmatprep.subr.bf16.mxu0 0
    %1705 = vmatpush1.bf16.msra.mxu0 0
    %1706 = vmatprep.subr.bf16.mxu0 0
    %1707 = vmatpush1.bf16.msra.mxu0 0
    %1708 = vmatprep.subr.bf16.mxu0 0
    %1709 = vmatpush1.bf16.msra.mxu0 0
    %1710 = vmatprep.subr.bf16.mxu0 0
    %1711 = vmatpush1.bf16.msra.mxu0 0
    %1712 = vmatprep.subr.bf16.mxu0 0
    %1713 = vmatpush1.bf16.msra.mxu0 0
    %1714 = vmatprep.subr.bf16.mxu0 0
    %1715 = vmatpush1.bf16.msra.mxu0 0
    %1716 = vmatprep.mubr.bf16.mxu0 0
    %1717 = vmatmul.mubr.bf16.gmra.mrb[0].mxu0 %v1679
    %v1718 = vpop.f32.mrb[0].mxu0
    %v1719 = vadd.f32 0.0, %v1718
    %v1720 = vpop.f32.mrb[0].mxu0
    %v1721 = vpop.f32.mrb[0].mxu0
    %v1722 = vpop.f32.mrb[0].mxu0
    %1723 = vdwg.mxu0
    %v1725 = vsel %vm1208, %v1392, 0
    %v1728 = vsel %vm1404, %v462, 0
    %1730 = vmatprep.subr.bf16.mxu0 0
    %1731 = vmatpush1.bf16.msra.mxu0 %v1728
    %1732 = vmatprep.subr.bf16.mxu0 0
    %1733 = vmatpush1.bf16.msra.mxu0 0
    %1734 = vmatprep.subr.bf16.mxu0 0
    %1735 = vmatpush1.bf16.msra.mxu0 0
    %1736 = vmatprep.subr.bf16.mxu0 0
    %1737 = vmatpush1.bf16.msra.mxu0 0
    %1738 = vmatprep.subr.bf16.mxu0 0
    %1739 = vmatpush1.bf16.msra.mxu0 0
    %1740 = vmatprep.subr.bf16.mxu0 0
    %1741 = vmatpush1.bf16.msra.mxu0 0
    %1742 = vmatprep.subr.bf16.mxu0 0
    %1743 = vmatpush1.bf16.msra.mxu0 0
    %1744 = vmatprep.subr.bf16.mxu0 0
    %1745 = vmatpush1.bf16.msra.mxu0 0
    %1746 = vmatprep.subr.bf16.mxu0 0
    %1747 = vmatpush1.bf16.msra.mxu0 0
    %1748 = vmatprep.subr.bf16.mxu0 0
    %1749 = vmatpush1.bf16.msra.mxu0 0
    %1750 = vmatprep.subr.bf16.mxu0 0
    %1751 = vmatpush1.bf16.msra.mxu0 0
    %1752 = vmatprep.subr.bf16.mxu0 0
    %1753 = vmatpush1.bf16.msra.mxu0 0
    %1754 = vmatprep.subr.bf16.mxu0 0
    %1755 = vmatpush1.bf16.msra.mxu0 0
    %1756 = vmatprep.subr.bf16.mxu0 0
    %1757 = vmatpush1.bf16.msra.mxu0 0
    %1758 = vmatprep.subr.bf16.mxu0 0
    %1759 = vmatpush1.bf16.msra.mxu0 0
    %1760 = vmatprep.subr.bf16.mxu0 0
    %1761 = vmatpush1.bf16.msra.mxu0 0
    %1762 = vmatprep.mubr.bf16.mxu0 0
    %1763 = vmatmul.mubr.bf16.gmra.mrb[0].mxu0 %v1725
    %v1764 = vpop.f32.mrb[0].mxu0
    %v1765 = vadd.f32 0.0, %v1764
    %v1766 = vpop.f32.mrb[0].mxu0
    %v1767 = vpop.f32.mrb[0].mxu0
    %v1768 = vpop.f32.mrb[0].mxu0
    %1769 = vdwg.mxu0
    %v1771 = vsel %vm1208, %v1393, 0
    %v1774 = vsel %vm1404, %v463, 0
    %1776 = vmatprep.subr.bf16.mxu0 0
    %1777 = vmatpush1.bf16.msra.mxu0 %v1774
    %1778 = vmatprep.subr.bf16.mxu0 0
    %1779 = vmatpush1.bf16.msra.mxu0 0
    %1780 = vmatprep.subr.bf16.mxu0 0
    %1781 = vmatpush1.bf16.msra.mxu0 0
    %1782 = vmatprep.subr.bf16.mxu0 0
    %1783 = vmatpush1.bf16.msra.mxu0 0
    %1784 = vmatprep.subr.bf16.mxu0 0
    %1785 = vmatpush1.bf16.msra.mxu0 0
    %1786 = vmatprep.subr.bf16.mxu0 0
    %1787 = vmatpush1.bf16.msra.mxu0 0
    %1788 = vmatprep.subr.bf16.mxu0 0
    %1789 = vmatpush1.bf16.msra.mxu0 0
    %1790 = vmatprep.subr.bf16.mxu0 0
    %1791 = vmatpush1.bf16.msra.mxu0 0
    %1792 = vmatprep.subr.bf16.mxu0 0
    %1793 = vmatpush1.bf16.msra.mxu0 0
    %1794 = vmatprep.subr.bf16.mxu0 0
    %1795 = vmatpush1.bf16.msra.mxu0 0
    %1796 = vmatprep.subr.bf16.mxu0 0
    %1797 = vmatpush1.bf16.msra.mxu0 0
    %1798 = vmatprep.subr.bf16.mxu0 0
    %1799 = vmatpush1.bf16.msra.mxu0 0
    %1800 = vmatprep.subr.bf16.mxu0 0
    %1801 = vmatpush1.bf16.msra.mxu0 0
    %1802 = vmatprep.subr.bf16.mxu0 0
    %1803 = vmatpush1.bf16.msra.mxu0 0
    %1804 = vmatprep.subr.bf16.mxu0 0
    %1805 = vmatpush1.bf16.msra.mxu0 0
    %1806 = vmatprep.subr.bf16.mxu0 0
    %1807 = vmatpush1.bf16.msra.mxu0 0
    %1808 = vmatprep.mubr.bf16.mxu0 0
    %1809 = vmatmul.mubr.bf16.gmra.mrb[0].mxu0 %v1771
    %v1810 = vpop.f32.mrb[0].mxu0
    %v1811 = vadd.f32 0.0, %v1810
    %v1812 = vpop.f32.mrb[0].mxu0
    %v1813 = vpop.f32.mrb[0].mxu0
    %v1814 = vpop.f32.mrb[0].mxu0
    %1815 = vdwg.mxu0
    %v1817 = vsel %vm1208, %v1394, 0
    %v1820 = vsel %vm1404, %v464, 0
    %1822 = vmatprep.subr.bf16.mxu0 0
    %1823 = vmatpush1.bf16.msra.mxu0 %v1820
    %1824 = vmatprep.subr.bf16.mxu0 0
    %1825 = vmatpush1.bf16.msra.mxu0 0
    %1826 = vmatprep.subr.bf16.mxu0 0
    %1827 = vmatpush1.bf16.msra.mxu0 0
    %1828 = vmatprep.subr.bf16.mxu0 0
    %1829 = vmatpush1.bf16.msra.mxu0 0
    %1830 = vmatprep.subr.bf16.mxu0 0
    %1831 = vmatpush1.bf16.msra.mxu0 0
    %1832 = vmatprep.subr.bf16.mxu0 0
    %1833 = vmatpush1.bf16.msra.mxu0 0
    %1834 = vmatprep.subr.bf16.mxu0 0
    %1835 = vmatpush1.bf16.msra.mxu0 0
    %1836 = vmatprep.subr.bf16.mxu0 0
    %1837 = vmatpush1.bf16.msra.mxu0 0
    %1838 = vmatprep.subr.bf16.mxu0 0
    %1839 = vmatpush1.bf16.msra.mxu0 0
    %1840 = vmatprep.subr.bf16.mxu0 0
    %1841 = vmatpush1.bf16.msra.mxu0 0
    %1842 = vmatprep.subr.bf16.mxu0 0
    %1843 = vmatpush1.bf16.msra.mxu0 0
    %1844 = vmatprep.subr.bf16.mxu0 0
    %1845 = vmatpush1.bf16.msra.mxu0 0
    %1846 = vmatprep.subr.bf16.mxu0 0
    %1847 = vmatpush1.bf16.msra.mxu0 0
    %1848 = vmatprep.subr.bf16.mxu0 0
    %1849 = vmatpush1.bf16.msra.mxu0 0
    %1850 = vmatprep.subr.bf16.mxu0 0
    %1851 = vmatpush1.bf16.msra.mxu0 0
    %1852 = vmatprep.subr.bf16.mxu0 0
    %1853 = vmatpush1.bf16.msra.mxu0 0
    %1854 = vmatprep.mubr.bf16.mxu0 0
    %1855 = vmatmul.mubr.bf16.gmra.mrb[0].mxu0 %v1817
    %v1856 = vpop.f32.mrb[0].mxu0
    %v1857 = vadd.f32 0.0, %v1856
    %v1858 = vpop.f32.mrb[0].mxu0
    %v1859 = vpop.f32.mrb[0].mxu0
    %v1860 = vpop.f32.mrb[0].mxu0
    %1861 = vdwg.mxu0
    %v1863 = vsel %vm1208, %v1395, 0
    %v1866 = vsel %vm1404, %v465, 0
    %1868 = vmatprep.subr.bf16.mxu0 0
    %1869 = vmatpush1.bf16.msra.mxu0 %v1866
    %1870 = vmatprep.subr.bf16.mxu0 0
    %1871 = vmatpush1.bf16.msra.mxu0 0
    %1872 = vmatprep.subr.bf16.mxu0 0
    %1873 = vmatpush1.bf16.msra.mxu0 0
    %1874 = vmatprep.subr.bf16.mxu0 0
    %1875 = vmatpush1.bf16.msra.mxu0 0
    %1876 = vmatprep.subr.bf16.mxu0 0
    %1877 = vmatpush1.bf16.msra.mxu0 0
    %1878 = vmatprep.subr.bf16.mxu0 0
    %1879 = vmatpush1.bf16.msra.mxu0 0
    %1880 = vmatprep.subr.bf16.mxu0 0
    %1881 = vmatpush1.bf16.msra.mxu0 0
    %1882 = vmatprep.subr.bf16.mxu0 0
    %1883 = vmatpush1.bf16.msra.mxu0 0
    %1884 = vmatprep.subr.bf16.mxu0 0
    %1885 = vmatpush1.bf16.msra.mxu0 0
    %1886 = vmatprep.subr.bf16.mxu0 0
    %1887 = vmatpush1.bf16.msra.mxu0 0
    %1888 = vmatprep.subr.bf16.mxu0 0
    %1889 = vmatpush1.bf16.msra.mxu0 0
    %1890 = vmatprep.subr.bf16.mxu0 0
    %1891 = vmatpush1.bf16.msra.mxu0 0
    %1892 = vmatprep.subr.bf16.mxu0 0
    %1893 = vmatpush1.bf16.msra.mxu0 0
    %1894 = vmatprep.subr.bf16.mxu0 0
    %1895 = vmatpush1.bf16.msra.mxu0 0
    %1896 = vmatprep.subr.bf16.mxu0 0
    %1897 = vmatpush1.bf16.msra.mxu0 0
    %1898 = vmatprep.subr.bf16.mxu0 0
    %1899 = vmatpush1.bf16.msra.mxu0 0
    %1900 = vmatprep.mubr.bf16.mxu0 0
    %1901 = vmatmul.mubr.bf16.gmra.mrb[0].mxu0 %v1863
    %v1902 = vpop.f32.mrb[0].mxu0
    %v1903 = vadd.f32 0.0, %v1902
    %v1904 = vpop.f32.mrb[0].mxu0
    %v1905 = vpop.f32.mrb[0].mxu0
    %v1906 = vpop.f32.mrb[0].mxu0
    %1907 = vdwg.mxu0
    %v1909 = vsel %vm1208, %v1396, 0
    %v1912 = vsel %vm1404, %v466, 0
    %1914 = vmatprep.subr.bf16.mxu0 0
    %1915 = vmatpush1.bf16.msra.mxu0 %v1912
    %1916 = vmatprep.subr.bf16.mxu0 0
    %1917 = vmatpush1.bf16.msra.mxu0 0
    %1918 = vmatprep.subr.bf16.mxu0 0
    %1919 = vmatpush1.bf16.msra.mxu0 0
    %1920 = vmatprep.subr.bf16.mxu0 0
    %1921 = vmatpush1.bf16.msra.mxu0 0
    %1922 = vmatprep.subr.bf16.mxu0 0
    %1923 = vmatpush1.bf16.msra.mxu0 0
    %1924 = vmatprep.subr.bf16.mxu0 0
    %1925 = vmatpush1.bf16.msra.mxu0 0
    %1926 = vmatprep.subr.bf16.mxu0 0
    %1927 = vmatpush1.bf16.msra.mxu0 0
    %1928 = vmatprep.subr.bf16.mxu0 0
    %1929 = vmatpush1.bf16.msra.mxu0 0
    %1930 = vmatprep.subr.bf16.mxu0 0
    %1931 = vmatpush1.bf16.msra.mxu0 0
    %1932 = vmatprep.subr.bf16.mxu0 0
    %1933 = vmatpush1.bf16.msra.mxu0 0
    %1934 = vmatprep.subr.bf16.mxu0 0
    %1935 = vmatpush1.bf16.msra.mxu0 0
    %1936 = vmatprep.subr.bf16.mxu0 0
    %1937 = vmatpush1.bf16.msra.mxu0 0
    %1938 = vmatprep.subr.bf16.mxu0 0
    %1939 = vmatpush1.bf16.msra.mxu0 0
    %1940 = vmatprep.subr.bf16.mxu0 0
    %1941 = vmatpush1.bf16.msra.mxu0 0
    %1942 = vmatprep.subr.bf16.mxu0 0
    %1943 = vmatpush1.bf16.msra.mxu0 0
    %1944 = vmatprep.subr.bf16.mxu0 0
    %1945 = vmatpush1.bf16.msra.mxu0 0
    %1946 = vmatprep.mubr.bf16.mxu0 0
    %1947 = vmatmul.mubr.bf16.gmra.mrb[0].mxu0 %v1909
    %v1948 = vpop.f32.mrb[0].mxu0
    %v1949 = vadd.f32 0.0, %v1948
    %v1950 = vpop.f32.mrb[0].mxu0
    %v1951 = vpop.f32.mrb[0].mxu0
    %v1952 = vpop.f32.mrb[0].mxu0
    %1953 = vdwg.mxu0
    %v1955 = vsel %vm1208, %v1397, 0
    %v1958 = vsel %vm1404, %v467, 0
    %1960 = vmatprep.subr.bf16.mxu0 0
    %1961 = vmatpush1.bf16.msra.mxu0 %v1958
    %1962 = vmatprep.subr.bf16.mxu0 0
    %1963 = vmatpush1.bf16.msra.mxu0 0
    %1964 = vmatprep.subr.bf16.mxu0 0
    %1965 = vmatpush1.bf16.msra.mxu0 0
    %1966 = vmatprep.subr.bf16.mxu0 0
    %1967 = vmatpush1.bf16.msra.mxu0 0
    %1968 = vmatprep.subr.bf16.mxu0 0
    %1969 = vmatpush1.bf16.msra.mxu0 0
    %1970 = vmatprep.subr.bf16.mxu0 0
    %1971 = vmatpush1.bf16.msra.mxu0 0
    %1972 = vmatprep.subr.bf16.mxu0 0
    %1973 = vmatpush1.bf16.msra.mxu0 0
    %1974 = vmatprep.subr.bf16.mxu0 0
    %1975 = vmatpush1.bf16.msra.mxu0 0
    %1976 = vmatprep.subr.bf16.mxu0 0
    %1977 = vmatpush1.bf16.msra.mxu0 0
    %1978 = vmatprep.subr.bf16.mxu0 0
    %1979 = vmatpush1.bf16.msra.mxu0 0
    %1980 = vmatprep.subr.bf16.mxu0 0
    %1981 = vmatpush1.bf16.msra.mxu0 0
    %1982 = vmatprep.subr.bf16.mxu0 0
    %1983 = vmatpush1.bf16.msra.mxu0 0
    %1984 = vmatprep.subr.bf16.mxu0 0
    %1985 = vmatpush1.bf16.msra.mxu0 0
    %1986 = vmatprep.subr.bf16.mxu0 0
    %1987 = vmatpush1.bf16.msra.mxu0 0
    %1988 = vmatprep.subr.bf16.mxu0 0
    %1989 = vmatpush1.bf16.msra.mxu0 0
    %1990 = vmatprep.subr.bf16.mxu0 0
    %1991 = vmatpush1.bf16.msra.mxu0 0
    %1992 = vmatprep.mubr.bf16.mxu0 0
    %1993 = vmatmul.mubr.bf16.gmra.mrb[0].mxu0 %v1955
    %v1994 = vpop.f32.mrb[0].mxu0
    %v1995 = vadd.f32 0.0, %v1994
    %v1996 = vpop.f32.mrb[0].mxu0
    %v1997 = vpop.f32.mrb[0].mxu0
    %v1998 = vpop.f32.mrb[0].mxu0
    %1999 = vdwg.mxu0
    %v2001 = vsel %vm1208, %v1398, 0
    %v2004 = vsel %vm1404, %v468, 0
    %2006 = vmatprep.subr.bf16.mxu0 0
    %2007 = vmatpush1.bf16.msra.mxu0 %v2004
    %2008 = vmatprep.subr.bf16.mxu0 0
    %2009 = vmatpush1.bf16.msra.mxu0 0
    %2010 = vmatprep.subr.bf16.mxu0 0
    %2011 = vmatpush1.bf16.msra.mxu0 0
    %2012 = vmatprep.subr.bf16.mxu0 0
    %2013 = vmatpush1.bf16.msra.mxu0 0
    %2014 = vmatprep.subr.bf16.mxu0 0
    %2015 = vmatpush1.bf16.msra.mxu0 0
    %2016 = vmatprep.subr.bf16.mxu0 0
    %2017 = vmatpush1.bf16.msra.mxu0 0
    %2018 = vmatprep.subr.bf16.mxu0 0
    %2019 = vmatpush1.bf16.msra.mxu0 0
    %2020 = vmatprep.subr.bf16.mxu0 0
    %2021 = vmatpush1.bf16.msra.mxu0 0
    %2022 = vmatprep.subr.bf16.mxu0 0
    %2023 = vmatpush1.bf16.msra.mxu0 0
    %2024 = vmatprep.subr.bf16.mxu0 0
    %2025 = vmatpush1.bf16.msra.mxu0 0
    %2026 = vmatprep.subr.bf16.mxu0 0
    %2027 = vmatpush1.bf16.msra.mxu0 0
    %2028 = vmatprep.subr.bf16.mxu0 0
    %2029 = vmatpush1.bf16.msra.mxu0 0
    %2030 = vmatprep.subr.bf16.mxu0 0
    %2031 = vmatpush1.bf16.msra.mxu0 0
    %2032 = vmatprep.subr.bf16.mxu0 0
    %2033 = vmatpush1.bf16.msra.mxu0 0
    %2034 = vmatprep.subr.bf16.mxu0 0
    %2035 = vmatpush1.bf16.msra.mxu0 0
    %2036 = vmatprep.subr.bf16.mxu0 0
    %2037 = vmatpush1.bf16.msra.mxu0 0
    %2038 = vmatprep.mubr.bf16.mxu0 0
    %2039 = vmatmul.mubr.bf16.gmra.mrb[0].mxu0 %v2001
    %v2040 = vpop.f32.mrb[0].mxu0
    %v2041 = vadd.f32 0.0, %v2040
    %v2042 = vpop.f32.mrb[0].mxu0
    %v2043 = vpop.f32.mrb[0].mxu0
    %v2044 = vpop.f32.mrb[0].mxu0
    %2045 = vdwg.mxu0
    %v2047 = vsel %vm1208, %v1399, 0
    %v2050 = vsel %vm1404, %v469, 0
    %2052 = vmatprep.subr.bf16.mxu0 0
    %2053 = vmatpush1.bf16.msra.mxu0 %v2050
    %2054 = vmatprep.subr.bf16.mxu0 0
    %2055 = vmatpush1.bf16.msra.mxu0 0
    %2056 = vmatprep.subr.bf16.mxu0 0
    %2057 = vmatpush1.bf16.msra.mxu0 0
    %2058 = vmatprep.subr.bf16.mxu0 0
    %2059 = vmatpush1.bf16.msra.mxu0 0
    %2060 = vmatprep.subr.bf16.mxu0 0
    %2061 = vmatpush1.bf16.msra.mxu0 0
    %2062 = vmatprep.subr.bf16.mxu0 0
    %2063 = vmatpush1.bf16.msra.mxu0 0
    %2064 = vmatprep.subr.bf16.mxu0 0
    %2065 = vmatpush1.bf16.msra.mxu0 0
    %2066 = vmatprep.subr.bf16.mxu0 0
    %2067 = vmatpush1.bf16.msra.mxu0 0
    %2068 = vmatprep.subr.bf16.mxu0 0
    %2069 = vmatpush1.bf16.msra.mxu0 0
    %2070 = vmatprep.subr.bf16.mxu0 0
    %2071 = vmatpush1.bf16.msra.mxu0 0
    %2072 = vmatprep.subr.bf16.mxu0 0
    %2073 = vmatpush1.bf16.msra.mxu0 0
    %2074 = vmatprep.subr.bf16.mxu0 0
    %2075 = vmatpush1.bf16.msra.mxu0 0
    %2076 = vmatprep.subr.bf16.mxu0 0
    %2077 = vmatpush1.bf16.msra.mxu0 0
    %2078 = vmatprep.subr.bf16.mxu0 0
    %2079 = vmatpush1.bf16.msra.mxu0 0
    %2080 = vmatprep.subr.bf16.mxu0 0
    %2081 = vmatpush1.bf16.msra.mxu0 0
    %2082 = vmatprep.subr.bf16.mxu0 0
    %2083 = vmatpush1.bf16.msra.mxu0 0
    %2084 = vmatprep.mubr.bf16.mxu0 0
    %2085 = vmatmul.mubr.bf16.gmra.mrb[0].mxu0 %v2047
    %v2086 = vpop.f32.mrb[0].mxu0
    %v2087 = vadd.f32 0.0, %v2086
    %v2088 = vpop.f32.mrb[0].mxu0
    %v2089 = vpop.f32.mrb[0].mxu0
    %v2090 = vpop.f32.mrb[0].mxu0
    %2091 = vdwg.mxu0
    %v2093 = vsel %vm1208, %v1400, 0
    %v2096 = vsel %vm1404, %v470, 0
    %2098 = vmatprep.subr.bf16.mxu0 0
    %2099 = vmatpush1.bf16.msra.mxu0 %v2096
    %2100 = vmatprep.subr.bf16.mxu0 0
    %2101 = vmatpush1.bf16.msra.mxu0 0
    %2102 = vmatprep.subr.bf16.mxu0 0
    %2103 = vmatpush1.bf16.msra.mxu0 0
    %2104 = vmatprep.subr.bf16.mxu0 0
    %2105 = vmatpush1.bf16.msra.mxu0 0
    %2106 = vmatprep.subr.bf16.mxu0 0
    %2107 = vmatpush1.bf16.msra.mxu0 0
    %2108 = vmatprep.subr.bf16.mxu0 0
    %2109 = vmatpush1.bf16.msra.mxu0 0
    %2110 = vmatprep.subr.bf16.mxu0 0
    %2111 = vmatpush1.bf16.msra.mxu0 0
    %2112 = vmatprep.subr.bf16.mxu0 0
    %2113 = vmatpush1.bf16.msra.mxu0 0
    %2114 = vmatprep.subr.bf16.mxu0 0
    %2115 = vmatpush1.bf16.msra.mxu0 0
    %2116 = vmatprep.subr.bf16.mxu0 0
    %2117 = vmatpush1.bf16.msra.mxu0 0
    %2118 = vmatprep.subr.bf16.mxu0 0
    %2119 = vmatpush1.bf16.msra.mxu0 0
    %2120 = vmatprep.subr.bf16.mxu0 0
    %2121 = vmatpush1.bf16.msra.mxu0 0
    %2122 = vmatprep.subr.bf16.mxu0 0
    %2123 = vmatpush1.bf16.msra.mxu0 0
    %2124 = vmatprep.subr.bf16.mxu0 0
    %2125 = vmatpush1.bf16.msra.mxu0 0
    %2126 = vmatprep.subr.bf16.mxu0 0
    %2127 = vmatpush1.bf16.msra.mxu0 0
    %2128 = vmatprep.subr.bf16.mxu0 0
    %2129 = vmatpush1.bf16.msra.mxu0 0
    %2130 = vmatprep.mubr.bf16.mxu0 0
    %2131 = vmatmul.mubr.bf16.gmra.mrb[0].mxu0 %v2093
    %v2132 = vpop.f32.mrb[0].mxu0
    %v2133 = vadd.f32 0.0, %v2132
    %v2134 = vpop.f32.mrb[0].mxu0
    %v2135 = vpop.f32.mrb[0].mxu0
    %v2136 = vpop.f32.mrb[0].mxu0
    %2137 = vdwg.mxu0
    %2140 = vrot.lane.b32.xlu0 %v1535, 16
    %v2141 = vpop.permute.xlu0 %2140
    %2142 = vrot.lane.b32.xlu0 %v1581, 16
    %v2143 = vpop.permute.xlu0 %2142
    %2148 = vrot.lane.b32.xlu0 %v1627, 32
    %v2149 = vpop.permute.xlu0 %2148
    %2150 = vrot.lane.b32.xlu0 %v1673, 32
    %v2151 = vpop.permute.xlu0 %2150
    %2156 = vrot.lane.b32.xlu0 %v1719, 48
    %v2157 = vpop.permute.xlu0 %2156
    %2158 = vrot.lane.b32.xlu0 %v1765, 48
    %v2159 = vpop.permute.xlu0 %2158
    %2164 = vrot.lane.b32.xlu0 %v1811, 64
    %v2165 = vpop.permute.xlu0 %2164
    %2166 = vrot.lane.b32.xlu0 %v1857, 64
    %v2167 = vpop.permute.xlu0 %2166
    %2172 = vrot.lane.b32.xlu0 %v1903, 80
    %v2173 = vpop.permute.xlu0 %2172
    %2174 = vrot.lane.b32.xlu0 %v1949, 80
    %v2175 = vpop.permute.xlu0 %2174
    %2180 = vrot.lane.b32.xlu0 %v1995, 96
    %v2181 = vpop.permute.xlu0 %2180
    %2182 = vrot.lane.b32.xlu0 %v2041, 96
    %v2183 = vpop.permute.xlu0 %2182
    %2188 = vrot.lane.b32.xlu0 %v2087, 112
    %v2189 = vpop.permute.xlu0 %2188
    %2190 = vrot.lane.b32.xlu0 %v2133, 112
    %v2191 = vpop.permute.xlu0 %2190
    %v2194 = vsel %vm471, %v1443, %v2141
    %v2195 = vsel %vm471, %v1489, %v2143
    %vm2196 = vcmask 261120
    %v2197 = vsel %vm2196, %v2194, %v2149
    %v2198 = vsel %vm2196, %v2195, %v2151
    %vm2199 = vcmask 392192
    %v2200 = vsel %vm2199, %v2197, %v2157
    %v2201 = vsel %vm2199, %v2198, %v2159
    %vm2202 = vcmask 523264
    %v2203 = vsel %vm2202, %v2200, %v2165
    %v2204 = vsel %vm2202, %v2201, %v2167
    %vm2205 = vcmask 654336
    %v2206 = vsel %vm2205, %v2203, %v2173
    %v2207 = vsel %vm2205, %v2204, %v2175
    %vm2208 = vcmask 785408
    %v2209 = vsel %vm2208, %v2206, %v2181
    %v2210 = vsel %vm2208, %v2207, %v2183
    %vm2211 = vcmask 916480
    %v2212 = vsel %vm2211, %v2209, %v2189
    %v2213 = vsel %vm2211, %v2210, %v2191
    %v2214 = vpack.c.bf16 %v2213, %v2212
    %v2215 = vld [vmem:[%s3] sm:$0xf]
    %v2216 = vld [vmem:[%s3 + $0x4] sm:$0xf]
    %v2217 = vld [vmem:[%s3 + $0x8] sm:$0xf]
    %v2218 = vld [vmem:[%s3 + $0xc] sm:$0xf]
    %v2219 = vld [vmem:[%s3 + $0x10] sm:$0xf]
    %v2220 = vld [vmem:[%s3 + $0x14] sm:$0xf]
    %v2221 = vld [vmem:[%s3 + $0x18] sm:$0xf]
    %v2222 = vld [vmem:[%s3 + $0x1c] sm:$0xf]
    %v2223 = vld [vmem:[%s3 + $0x20] sm:$0xf]
    %v2224 = vld [vmem:[%s3 + $0x24] sm:$0xf]
    %v2225 = vld [vmem:[%s3 + $0x28] sm:$0xf]
    %v2226 = vld [vmem:[%s3 + $0x2c] sm:$0xf]
    %v2227 = vld [vmem:[%s3 + $0x30] sm:$0xf]
    %v2228 = vld [vmem:[%s3 + $0x34] sm:$0xf]
    %v2229 = vld [vmem:[%s3 + $0x38] sm:$0xf]
    %v2230 = vld [vmem:[%s3 + $0x3c] sm:$0xf]
    %v2231 = vld [vmem:[%s4] sm:$0x1]
    %v2233 = vlaneseq
    %v2234 = vshrl.u32 %v2233, 7
    %v2235 = vsub.s32 0, %v2234
    %v2236 = vrot.slane %v2231, %v2235
    %v2254 = vunpack.c.l.b16 %v2215
    %v2255 = vunpack.c.l.b16 %v2216
    %v2256 = vunpack.c.l.b16 %v2217
    %v2257 = vunpack.c.l.b16 %v2218
    %v2258 = vunpack.c.l.b16 %v2219
    %v2259 = vunpack.c.l.b16 %v2220
    %v2260 = vunpack.c.l.b16 %v2221
    %v2261 = vunpack.c.l.b16 %v2222
    %v2262 = vunpack.c.l.b16 %v2223
    %v2263 = vunpack.c.l.b16 %v2224
    %v2264 = vunpack.c.l.b16 %v2225
    %v2265 = vunpack.c.l.b16 %v2226
    %v2266 = vunpack.c.l.b16 %v2227
    %v2267 = vunpack.c.l.b16 %v2228
    %v2268 = vunpack.c.l.b16 %v2229
    %v2269 = vunpack.c.l.b16 %v2230
    %v2270 = vpack.c.b16 %v2255, %v2254
    %v2271 = vpack.c.b16 %v2257, %v2256
    %v2272 = vpack.c.b16 %v2259, %v2258
    %v2273 = vpack.c.b16 %v2261, %v2260
    %v2274 = vpack.c.b16 %v2263, %v2262
    %v2275 = vpack.c.b16 %v2265, %v2264
    %v2276 = vpack.c.b16 %v2267, %v2266
    %v2277 = vpack.c.b16 %v2269, %v2268
    %2286 = vmatprep.subr.bf16.mxu0 0
    %2287 = vmatpush1.bf16.msra.mxu0 %v2270
    %2288 = vmatprep.subr.bf16.mxu0 0
    %2289 = vmatpush1.bf16.msra.mxu0 %v2271
    %2290 = vmatprep.subr.bf16.mxu0 0
    %2291 = vmatpush1.bf16.msra.mxu0 %v2272
    %2292 = vmatprep.subr.bf16.mxu0 0
    %2293 = vmatpush1.bf16.msra.mxu0 %v2273
    %2294 = vmatprep.subr.bf16.mxu0 0
    %2295 = vmatpush1.bf16.msra.mxu0 %v2274
    %2296 = vmatprep.subr.bf16.mxu0 0
    %2297 = vmatpush1.bf16.msra.mxu0 %v2275
    %2298 = vmatprep.subr.bf16.mxu0 0
    %2299 = vmatpush1.bf16.msra.mxu0 %v2276
    %2300 = vmatprep.subr.bf16.mxu0 0
    %2301 = vmatpush1.bf16.msra.mxu0 %v2277
    %2302 = vmatprep.subr.bf16.mxu0 0
    %2303 = vmatpush1.bf16.msra.mxu0 0
    %2304 = vmatprep.subr.bf16.mxu0 0
    %2305 = vmatpush1.bf16.msra.mxu0 0
    %2306 = vmatprep.subr.bf16.mxu0 0
    %2307 = vmatpush1.bf16.msra.mxu0 0
    %2308 = vmatprep.subr.bf16.mxu0 0
    %2309 = vmatpush1.bf16.msra.mxu0 0
    %2310 = vmatprep.subr.bf16.mxu0 0
    %2311 = vmatpush1.bf16.msra.mxu0 0
    %2312 = vmatprep.subr.bf16.mxu0 0
    %2313 = vmatpush1.bf16.msra.mxu0 0
    %2314 = vmatprep.subr.bf16.mxu0 0
    %2315 = vmatpush1.bf16.msra.mxu0 0
    %2316 = vmatprep.subr.bf16.mxu0 0
    %2317 = vmatpush1.bf16.msra.mxu0 0
    %2318 = vmatprep.mubr.bf16.mxu0 0
    %2319 = vmatmul.mubr.bf16.gmra.mrb[0].mxu0 %v2214
    %v2320 = vpop.f32.mrb[0].mxu0
    %v2321 = vadd.f32 %v2236, %v2320
    %v2322 = vpop.f32.mrb[0].mxu0
    %v2323 = vpop.f32.mrb[0].mxu0
    %v2324 = vadd.f32 %v2236, %v2323
    %v2325 = vpop.f32.mrb[0].mxu0
    %2326 = vdwg.mxu0
    %2327 = vst [vmem:[#allocation2] sm:$0xff] %v2321
    %2328 = vst [vmem:[#allocation2 + $0x8] sm:$0xff] %v2324
    // Predicated region
    $region22: #{multihead_attention_pallas.1} parent=1 // pred_check
      _
    $region23: #{multihead_attention_pallas.1} parent=1 // pred_check_branch
      %2330 = sbr.rel (0) target = $region25
    $region24: #{multihead_attention_pallas.1} parent=1 // pred_region
      %s2332 = ssub.s32 256, 256
      %2333 = vsyncadd [#allocation3], %s2332
      %s2334 = sshll.u32 [#allocation2], 4
      %s2335 = int_to_ptr.vmem [resolvable:$true] %s2334
      %2340 = dma.vmem_to_hbm [thread:$0]  %s2335, 256, %s5, [#allocation3], 128, 128, 8
    $region25: #{multihead_attention_pallas.1} parent=1 // pred_fallthru
      _
    // Predicated region
    $region26: #{multihead_attention_pallas.1} parent=1 // pred_check
      _
    $region27: #{multihead_attention_pallas.1} parent=1 // pred_check_branch
      %2342 = sbr.rel (0) target = $region29
    $region28: #{multihead_attention_pallas.1} parent=1 // pred_region
      %2343 = dma.done [#allocation3], 256
    $region29: #{multihead_attention_pallas.1} parent=1 // pred_fallthru
      _
    %2344 = vsyncpa [#allocation3], 1

</llo_original>
